<compile_context>
chip_gen: v7x
topology: tpu7x:2x2x1
jax: 0.10.0
libtpu: 0.0.40
codegen_flags: <defaults>
</compile_context>

<pallas_src>
import jax
import jax.numpy as jnp
from jax.experimental import pallas as pl
from jax.experimental.pallas import tpu as pltpu

# ---------------------------------------------------------------------------
# Model hyper-parameters (small, consistent with the forward-pass structure)
# ---------------------------------------------------------------------------
PATCH = 12            # patch length of the masked auto-encoders
T_LONG = 864          # long-history length -> 864 / 12 = 72 patches (slice 71:72)
N_PATCH = T_LONG // PATCH
EMBED = 32            # Mask embedding dim (per branch)
MLP_HID = 64          # Mask MLP hidden dim (per branch)
L_SHORT = 12          # short-term history length
C_SHORT = 3           # short-term history channels
L_OUT = 12            # prediction horizon
BACK_HID = 64         # backend hidden width
N_NODES = 16          # number of nodes (reference uses 307)

E2 = 2 * EMBED        # fused tmae|smae embedding width
M2 = 2 * MLP_HID      # fused tmae|smae MLP width


# ---------------------------------------------------------------------------
# Weight-slab layout (single packed f32 operand, 8-row aligned blocks,
# bias folded in as the last meaningful row of every block)
# ---------------------------------------------------------------------------
def _ceil8(n):
    return ((n + 7) // 8) * 8


ROWS_WE = PATCH + 1           # 13  : [PATCH+1, 2E]   patch embedding (+bias)
ROWS_W1 = E2 + 1              # 65  : [2E+1, 2M]      MLP layer 1 (+bias)
ROWS_W2 = M2 + 1              # 129 : [2M+1, 2E]      MLP layer 2 (+bias)
ROWS_WIXC = L_SHORT           # 12  : [L, H]          backend input, per channel
ROWS_WIH = E2 + 1             # 65  : [2E+1, H]       backend input, hidden (+bias)
ROWS_WM = BACK_HID + 1        # 65  : [H+1, H]        backend mid (+bias)
ROWS_WO = BACK_HID + 1        # 65  : [H+1, L_OUT]    backend out (+bias)

OFF_WE = 0
OFF_W1 = OFF_WE + _ceil8(ROWS_WE)          # 16
OFF_W2 = OFF_W1 + _ceil8(ROWS_W1)          # 88
OFF_WIX = OFF_W2 + _ceil8(ROWS_W2)         # 224
WIX_STRIDE = _ceil8(ROWS_WIXC)             # 16
OFF_WIH = OFF_WIX + C_SHORT * WIX_STRIDE   # 272
OFF_WM = OFF_WIH + _ceil8(ROWS_WIH)        # 344
OFF_WO = OFF_WM + _ceil8(ROWS_WM)          # 416
SLAB_ROWS = OFF_WO + _ceil8(ROWS_WO)       # 488
SLAB_LANES = 128


# ---------------------------------------------------------------------------
# Fused kernel: dual Mask encoder (patch 71 only) + residual + backend MLP
# ---------------------------------------------------------------------------
def _fused_stdmae_kernel(hist_ref, long_ref, w_ref, o_ref):
    f32 = jnp.float32
    B, L, N, C = hist_ref.shape

    # ---- dual (tmae|smae) Mask encoder on patch 71, channel 0 -------------
    # long_ref window is [1, PATCH, N, 2]; take channel 0 -> [PATCH, N].
    lp = long_ref[0, :, :, 0]
    # bias folded: extra ones ROW (we contract axis 0, i.e. the transpose is
    # fused into the dot instead of an explicit XLU transpose).
    lp_aug = jnp.concatenate([lp, jnp.ones((1, N), f32)], axis=0)   # [PATCH+1, N]
    We = w_ref[OFF_WE:OFF_WE + ROWS_WE, :E2]                        # [PATCH+1, 2E]
    h = jax.lax.dot_general(lp_aug, We, (((0,), (0,)), ((), ())),
                            preferred_element_type=f32)             # [N, 2E]
    h = jnp.maximum(h, 0.0)

    ones_n = jnp.ones((N, 1), f32)
    W1 = w_ref[OFF_W1:OFF_W1 + ROWS_W1, :M2]                        # [2E+1, 2M]
    h1 = jnp.maximum(
        jnp.dot(jnp.concatenate([h, ones_n], axis=1), W1,
                preferred_element_type=f32), 0.0)                   # [N, 2M]
    W2 = w_ref[OFF_W2:OFF_W2 + ROWS_W2, :E2]                        # [2M+1, 2E]
    h2 = jnp.dot(jnp.concatenate([h1, ones_n], axis=1), W2,
                 preferred_element_type=f32)                        # [N, 2E]
    # TODO(synk): residual applied to the post-ReLU embedding; confirm against
    #             the real Mask module once its source is available.
    hid = h2 + h                                                    # [N, 2E]

    # ---- backend input layer ----------------------------------------------
    # hidden-state branch computed ONCE for the N unique nodes (bias folded).
    Wih = w_ref[OFF_WIH:OFF_WIH + ROWS_WIH, :BACK_HID]              # [2E+1, H]
    z_hid = jnp.dot(jnp.concatenate([hid, ones_n], axis=1), Wih,
                    preferred_element_type=f32)                     # [N, H]

    # short-history branch: per (batch, channel) 2-D dot contracting the L
    # axis — this fuses the [B,L,N,C] -> [B*N, L*C] flatten into the matmuls.
    rows = []
    for b in range(B):
        zb = z_hid
        for c in range(C):
            off = OFF_WIX + c * WIX_STRIDE
            Wix_c = w_ref[off:off + L_SHORT, :BACK_HID]             # [L, H]
            hc = hist_ref[b, :, :, c]                               # [L, N]
            zb = zb + jax.lax.dot_general(hc, Wix_c, (((0,), (0,)), ((), ())),
                                          preferred_element_type=f32)
        rows.append(zb)
    z = rows[0] if B == 1 else jnp.concatenate(rows, axis=0)        # [B*N, H]
    z = jnp.maximum(z, 0.0)

    # ---- backend mid / output layers --------------------------------------
    ones_r = jnp.ones((B * N, 1), f32)
    Wm = w_ref[OFF_WM:OFF_WM + ROWS_WM, :BACK_HID]                  # [H+1, H]
    z = jnp.maximum(
        jnp.dot(jnp.concatenate([z, ones_r], axis=1), Wm,
                preferred_element_type=f32), 0.0)
    Wo = w_ref[OFF_WO:OFF_WO + ROWS_WO, :L_OUT]                     # [H+1, L_OUT]
    y = jnp.dot(jnp.concatenate([z, ones_r], axis=1), Wo,
                preferred_element_type=f32)                         # [B*N, L_OUT]
    o_ref[...] = y.astype(o_ref.dtype)


# ---------------------------------------------------------------------------
# Module forward (mirrors STDITRVIRLONG01.forward) — ONE pallas_call
# ---------------------------------------------------------------------------
def stditrvirlong01_forward(history_data, long_history_data, weight_slab):
    """history_data: [B, L, N, 3], long_history_data: [1, T_LONG, N, 2]
    -> prediction [B, N, L_OUT, 1]."""
    B, L, N, C = history_data.shape
    y = pl.pallas_call(
        _fused_stdmae_kernel,
        out_shape=jax.ShapeDtypeStruct((B * N, L_OUT), jnp.float32),
        grid=(1,),
        in_specs=[
            # full short history (tiny)
            pl.BlockSpec((B, L, N, C), lambda i: (0, 0, 0, 0)),
            # only the patch-71 window of the long history is DMA'd
            pl.BlockSpec((1, PATCH, N, 2), lambda i: (0, N_PATCH - 1, 0, 0)),
            # one packed weight slab (weights + folded biases)
            pl.BlockSpec((SLAB_ROWS, SLAB_LANES), lambda i: (0, 0)),
        ],
        out_specs=pl.BlockSpec((B * N, L_OUT), lambda i: (0, 0)),
        compiler_params=pltpu.CompilerParams(
            dimension_semantics=("arbitrary",)),
    )(history_data, long_history_data, weight_slab)
    # backend output [B, L_OUT, N] -> transpose(1,2) -> unsqueeze(-1)
    return y.reshape(B, N, L_OUT)[..., None]


# ---------------------------------------------------------------------------
# Parameter construction (deterministic, per branch) and slab packing
# ---------------------------------------------------------------------------
def _init_linear(key, k, n, scale=0.05):
    kw, kb = jax.random.split(key)
    return (scale * jax.random.normal(kw, (k, n), jnp.float32),
            scale * jax.random.normal(kb, (n,), jnp.float32))


def init_mask_params(key):
    k0, k1, k2 = jax.random.split(key, 3)
    We, be = _init_linear(k0, PATCH, EMBED)
    W1, b1 = _init_linear(k1, EMBED, MLP_HID)
    W2, b2 = _init_linear(k2, MLP_HID, EMBED)
    return dict(We=We, be=be, W1=W1, b1=b1, W2=W2, b2=b2)


def init_backend_params(key):
    k0, k1, k2 = jax.random.split(key, 3)
    in_feat = L_SHORT * C_SHORT + E2
    W_in, b_in = _init_linear(k0, in_feat, BACK_HID)
    W_mid, b_mid = _init_linear(k1, BACK_HID, BACK_HID)
    W_out, b_out = _init_linear(k2, BACK_HID, L_OUT)
    return dict(W_in=W_in, b_in=b_in, W_mid=W_mid, b_mid=b_mid,
                W_out=W_out, b_out=b_out)


def build_weight_slab(tmae, smae, backend):
    """Pack all layers into one f32 [SLAB_ROWS, 128] slab, biases as extra rows.

    tmae/smae are fused: patch-embedding weights concatenated along the output
    dim, MLP weights block-diagonal, so one matmul per layer serves both
    branches and the channel concat is free.
    """
    slab = jnp.zeros((SLAB_ROWS, SLAB_LANES), jnp.float32)

    def put(s, off, W, b):
        Wb = jnp.concatenate([W, b.reshape(1, -1)], axis=0)
        r, c = Wb.shape
        return s.at[off:off + r, :c].set(Wb)

    We = jnp.concatenate([tmae["We"], smae["We"]], axis=1)            # [12, 64]
    be = jnp.concatenate([tmae["be"], smae["be"]])                    # [64]
    slab = put(slab, OFF_WE, We, be)

    W1 = jax.scipy.linalg.block_diag(tmae["W1"], smae["W1"])          # [64, 128]
    b1 = jnp.concatenate([tmae["b1"], smae["b1"]])                    # [128]
    slab = put(slab, OFF_W1, W1, b1)

    W2 = jax.scipy.linalg.block_diag(tmae["W2"], smae["W2"])          # [128, 64]
    b2 = jnp.concatenate([tmae["b2"], smae["b2"]])                    # [64]
    slab = put(slab, OFF_W2, W2, b2)

    W_in, b_in = backend["W_in"], backend["b_in"]
    nx = L_SHORT * C_SHORT
    # short-history rows of W_in are laid out per channel so the kernel's
    # per-channel dot_general (contracting L) matches the (l, c) flattening.
    for c in range(C_SHORT):
        Wix_c = W_in[:nx][c::C_SHORT, :]                              # [L, H]
        off = OFF_WIX + c * WIX_STRIDE
        slab = slab.at[off:off + L_SHORT, :BACK_HID].set(Wix_c)
    slab = put(slab, OFF_WIH, W_in[nx:], b_in)                        # hid rows + bias
    slab = put(slab, OFF_WM, backend["W_mid"], backend["b_mid"])
    slab = put(slab, OFF_WO, backend["W_out"], backend["b_out"])
    return slab


# ---------------------------------------------------------------------------
if __name__ == "__main__":
    key = jax.random.PRNGKey(0)
    k_hist, k_long, k_t, k_s, k_b = jax.random.split(key, 5)

    B = 1  # the reference forward's long history has batch 1
    history_data = jax.random.normal(
        k_hist, (B, L_SHORT, N_NODES, C_SHORT), jnp.float32)
    long_history_data = jax.random.normal(
        k_long, (1, T_LONG, N_NODES, 2), jnp.float32)

    tmae_params = init_mask_params(k_t)
    smae_params = init_mask_params(k_s)
    backend_params = init_backend_params(k_b)
    weight_slab = build_weight_slab(tmae_params, smae_params, backend_params)

    fwd = jax.jit(stditrvirlong01_forward)
    y_hat = fwd(history_data, long_history_data, weight_slab)
    y_hat = jax.block_until_ready(y_hat)

    assert y_hat.shape == (B, N_NODES, L_OUT, 1), y_hat.shape
    assert jnp.all(jnp.isfinite(y_hat))
    print("KERNEL_OK")
</pallas_src>

<mosaic_0001>
module attributes {stable_mosaic.version = 11 : i64} {
  func.func @_fused_stdmae_kernel(%arg0: i32, %arg1: memref<1x12x16x3xf32, #tpu.memory_space<vmem>>, %arg2: memref<1x12x16x2xf32, #tpu.memory_space<vmem>>, %arg3: memref<488x128xf32, #tpu.memory_space<vmem>>, %arg4: memref<16x12xf32, #tpu.memory_space<vmem>>) attributes {dimension_semantics = [#tpu.dimension_semantics<arbitrary>], iteration_bounds = array<i64: 1>, scalar_prefetch = 0 : i64, scratch_operands = 0 : i64, tpu.core_type = #tpu.core_type<tc>, window_params = [{pipeline_mode = #tpu.pipeline_mode<synchronous>, transform_indices = @transform_0, window_bounds = array<i64: 1, 12, 16, 3>}, {transform_indices = @transform_1, window_bounds = array<i64: 1, 12, 16, 2>}, {pipeline_mode = #tpu.pipeline_mode<synchronous>, transform_indices = @transform_2, window_bounds = array<i64: 488, 128>}, {pipeline_mode = #tpu.pipeline_mode<synchronous>, transform_indices = @transform_3, window_bounds = array<i64: 16, 12>}]} {
    %c0 = arith.constant 0 : index
    %c0_0 = arith.constant 0 : index
    %c0_1 = arith.constant 0 : index
    %c0_2 = arith.constant 0 : index
    %0 = vector.load %arg2[%c0, %c0_0, %c0_1, %c0_2] : memref<1x12x16x2xf32, #tpu.memory_space<vmem>>, vector<1x12x16x1xf32>
    %1 = vector.shape_cast %0 : vector<1x12x16x1xf32> to vector<12x16xf32>
    %cst = arith.constant 1.000000e+00 : f32
    %2 = vector.broadcast %cst : f32 to vector<1x16xf32>
    %3 = tpu.concatenate %1, %2 in 0 : vector<12x16xf32>, vector<1x16xf32> -> vector<13x16xf32>
    %c0_3 = arith.constant 0 : index
    %c0_4 = arith.constant 0 : index
    %4 = vector.load %arg3[%c0_3, %c0_4] : memref<488x128xf32, #tpu.memory_space<vmem>>, vector<13x64xf32>
    %cst_5 = arith.constant dense<0.000000e+00> : vector<16x64xf32>
    %5 = tpu.matmul %3, %4, %cst_5 {dimension_numbers = #tpu.dot_dimension_numbers<[0], [0], [1], [1], [0, 1, 1, 1], [], []>} : vector<13x16xf32>, vector<13x64xf32>, vector<16x64xf32> -> vector<16x64xf32>
    %cst_6 = arith.constant 0.000000e+00 : f32
    %6 = vector.broadcast %cst_6 : f32 to vector<16x64xf32>
    %7 = arith.maximumf %5, %6 : vector<16x64xf32>
    %cst_7 = arith.constant 1.000000e+00 : f32
    %8 = vector.broadcast %cst_7 : f32 to vector<16x1xf32>
    %c16 = arith.constant 16 : index
    %c0_8 = arith.constant 0 : index
    %9 = vector.load %arg3[%c16, %c0_8] : memref<488x128xf32, #tpu.memory_space<vmem>>, vector<65x128xf32>
    %10 = tpu.concatenate %7, %8 in 1 : vector<16x64xf32>, vector<16x1xf32> -> vector<16x65xf32>
    %cst_9 = arith.constant dense<0.000000e+00> : vector<16x128xf32>
    %11 = tpu.matmul %10, %9, %cst_9 {dimension_numbers = #tpu.dot_dimension_numbers<[1], [0], [0], [1], [0, 0, 1, 1], [], []>} : vector<16x65xf32>, vector<65x128xf32>, vector<16x128xf32> -> vector<16x128xf32>
    %cst_10 = arith.constant 0.000000e+00 : f32
    %12 = vector.broadcast %cst_10 : f32 to vector<16x128xf32>
    %13 = arith.maximumf %11, %12 : vector<16x128xf32>
    %c88 = arith.constant 88 : index
    %c0_11 = arith.constant 0 : index
    %14 = vector.load %arg3[%c88, %c0_11] : memref<488x128xf32, #tpu.memory_space<vmem>>, vector<129x64xf32>
    %15 = tpu.concatenate %13, %8 in 1 : vector<16x128xf32>, vector<16x1xf32> -> vector<16x129xf32>
    %cst_12 = arith.constant dense<0.000000e+00> : vector<16x64xf32>
    %16 = tpu.matmul %15, %14, %cst_12 {dimension_numbers = #tpu.dot_dimension_numbers<[1], [0], [0], [1], [0, 0, 1, 1], [], []>} : vector<16x129xf32>, vector<129x64xf32>, vector<16x64xf32> -> vector<16x64xf32>
    %17 = arith.addf %16, %7 : vector<16x64xf32>
    %c272 = arith.constant 272 : index
    %c0_13 = arith.constant 0 : index
    %18 = vector.load %arg3[%c272, %c0_13] : memref<488x128xf32, #tpu.memory_space<vmem>>, vector<65x64xf32>
    %19 = tpu.concatenate %17, %8 in 1 : vector<16x64xf32>, vector<16x1xf32> -> vector<16x65xf32>
    %cst_14 = arith.constant dense<0.000000e+00> : vector<16x64xf32>
    %20 = tpu.matmul %19, %18, %cst_14 {dimension_numbers = #tpu.dot_dimension_numbers<[1], [0], [0], [1], [0, 0, 1, 1], [], []>} : vector<16x65xf32>, vector<65x64xf32>, vector<16x64xf32> -> vector<16x64xf32>
    %c224 = arith.constant 224 : index
    %c0_15 = arith.constant 0 : index
    %21 = vector.load %arg3[%c224, %c0_15] : memref<488x128xf32, #tpu.memory_space<vmem>>, vector<12x64xf32>
    %c0_16 = arith.constant 0 : index
    %c0_17 = arith.constant 0 : index
    %c0_18 = arith.constant 0 : index
    %c0_19 = arith.constant 0 : index
    %22 = vector.load %arg1[%c0_16, %c0_17, %c0_18, %c0_19] : memref<1x12x16x3xf32, #tpu.memory_space<vmem>>, vector<1x12x16x1xf32>
    %23 = vector.shape_cast %22 : vector<1x12x16x1xf32> to vector<12x16xf32>
    %cst_20 = arith.constant dense<0.000000e+00> : vector<16x64xf32>
    %24 = tpu.matmul %23, %21, %cst_20 {dimension_numbers = #tpu.dot_dimension_numbers<[0], [0], [1], [1], [0, 1, 1, 1], [], []>} : vector<12x16xf32>, vector<12x64xf32>, vector<16x64xf32> -> vector<16x64xf32>
    %25 = arith.addf %20, %24 : vector<16x64xf32>
    %c240 = arith.constant 240 : index
    %c0_21 = arith.constant 0 : index
    %26 = vector.load %arg3[%c240, %c0_21] : memref<488x128xf32, #tpu.memory_space<vmem>>, vector<12x64xf32>
    %c0_22 = arith.constant 0 : index
    %c0_23 = arith.constant 0 : index
    %c0_24 = arith.constant 0 : index
    %c1 = arith.constant 1 : index
    %27 = vector.load %arg1[%c0_22, %c0_23, %c0_24, %c1] : memref<1x12x16x3xf32, #tpu.memory_space<vmem>>, vector<1x12x16x1xf32>
    %28 = vector.shape_cast %27 : vector<1x12x16x1xf32> to vector<12x16xf32>
    %cst_25 = arith.constant dense<0.000000e+00> : vector<16x64xf32>
    %29 = tpu.matmul %28, %26, %cst_25 {dimension_numbers = #tpu.dot_dimension_numbers<[0], [0], [1], [1], [0, 1, 1, 1], [], []>} : vector<12x16xf32>, vector<12x64xf32>, vector<16x64xf32> -> vector<16x64xf32>
    %30 = arith.addf %25, %29 : vector<16x64xf32>
    %c256 = arith.constant 256 : index
    %c0_26 = arith.constant 0 : index
    %31 = vector.load %arg3[%c256, %c0_26] : memref<488x128xf32, #tpu.memory_space<vmem>>, vector<12x64xf32>
    %c0_27 = arith.constant 0 : index
    %c0_28 = arith.constant 0 : index
    %c0_29 = arith.constant 0 : index
    %c2 = arith.constant 2 : index
    %32 = vector.load %arg1[%c0_27, %c0_28, %c0_29, %c2] : memref<1x12x16x3xf32, #tpu.memory_space<vmem>>, vector<1x12x16x1xf32>
    %33 = vector.shape_cast %32 : vector<1x12x16x1xf32> to vector<12x16xf32>
    %cst_30 = arith.constant dense<0.000000e+00> : vector<16x64xf32>
    %34 = tpu.matmul %33, %31, %cst_30 {dimension_numbers = #tpu.dot_dimension_numbers<[0], [0], [1], [1], [0, 1, 1, 1], [], []>} : vector<12x16xf32>, vector<12x64xf32>, vector<16x64xf32> -> vector<16x64xf32>
    %35 = arith.addf %30, %34 : vector<16x64xf32>
    %cst_31 = arith.constant 0.000000e+00 : f32
    %36 = vector.broadcast %cst_31 : f32 to vector<16x64xf32>
    %37 = arith.maximumf %35, %36 : vector<16x64xf32>
    %cst_32 = arith.constant 1.000000e+00 : f32
    %38 = vector.broadcast %cst_32 : f32 to vector<16x1xf32>
    %c344 = arith.constant 344 : index
    %c0_33 = arith.constant 0 : index
    %39 = vector.load %arg3[%c344, %c0_33] : memref<488x128xf32, #tpu.memory_space<vmem>>, vector<65x64xf32>
    %40 = tpu.concatenate %37, %38 in 1 : vector<16x64xf32>, vector<16x1xf32> -> vector<16x65xf32>
    %cst_34 = arith.constant dense<0.000000e+00> : vector<16x64xf32>
    %41 = tpu.matmul %40, %39, %cst_34 {dimension_numbers = #tpu.dot_dimension_numbers<[1], [0], [0], [1], [0, 0, 1, 1], [], []>} : vector<16x65xf32>, vector<65x64xf32>, vector<16x64xf32> -> vector<16x64xf32>
    %cst_35 = arith.constant 0.000000e+00 : f32
    %42 = vector.broadcast %cst_35 : f32 to vector<16x64xf32>
    %43 = arith.maximumf %41, %42 : vector<16x64xf32>
    %c416 = arith.constant 416 : index
    %c0_36 = arith.constant 0 : index
    %44 = vector.load %arg3[%c416, %c0_36] : memref<488x128xf32, #tpu.memory_space<vmem>>, vector<65x12xf32>
    %45 = tpu.concatenate %43, %38 in 1 : vector<16x64xf32>, vector<16x1xf32> -> vector<16x65xf32>
    %cst_37 = arith.constant dense<0.000000e+00> : vector<16x12xf32>
    %46 = tpu.matmul %45, %44, %cst_37 {dimension_numbers = #tpu.dot_dimension_numbers<[1], [0], [0], [1], [0, 0, 1, 1], [], []>} : vector<16x65xf32>, vector<65x12xf32>, vector<16x12xf32> -> vector<16x12xf32>
    %c0_38 = arith.constant 0 : index
    %c0_39 = arith.constant 0 : index
    %47 = vector.load %arg4[%c0_38, %c0_39] : memref<16x12xf32, #tpu.memory_space<vmem>>, vector<16x12xf32>
    tpu.vector_store %arg4[%c0_38, %c0_39], %46 {strides = array<i32>} : memref<16x12xf32, #tpu.memory_space<vmem>>, vector<16x12xf32>,
    return
  }
  func.func @transform_0(%arg0: i32) -> (i32, i32, i32, i32) {
    %c0_i32 = arith.constant 0 : i32
    %c0_i32_0 = arith.constant 0 : i32
    %c0_i32_1 = arith.constant 0 : i32
    %c0_i32_2 = arith.constant 0 : i32
    %c0_i32_3 = arith.constant 0 : i32
    return %c0_i32, %c0_i32_0, %c0_i32_1, %c0_i32_2 : i32, i32, i32, i32
  }
  func.func @transform_1(%arg0: i32) -> (i32, i32, i32, i32) {
    %c0_i32 = arith.constant 0 : i32
    %c71_i32 = arith.constant 71 : i32
    %c0_i32_0 = arith.constant 0 : i32
    %c0_i32_1 = arith.constant 0 : i32
    %c0_i32_2 = arith.constant 0 : i32
    return %c0_i32, %c71_i32, %c0_i32_0, %c0_i32_1 : i32, i32, i32, i32
  }
  func.func @transform_2(%arg0: i32) -> (i32, i32) {
    %c0_i32 = arith.constant 0 : i32
    %c0_i32_0 = arith.constant 0 : i32
    %c0_i32_1 = arith.constant 0 : i32
    return %c0_i32, %c0_i32_0 : i32, i32
  }
  func.func @transform_3(%arg0: i32) -> (i32, i32) {
    %c0_i32 = arith.constant 0 : i32
    %c0_i32_0 = arith.constant 0 : i32
    %c0_i32_1 = arith.constant 0 : i32
    return %c0_i32, %c0_i32_0 : i32, i32
  }
}

</mosaic_0001>

<llo_original>
// kernel: stditrvirlong01_forward.1
$region0: #{stditrvirlong01_forward.1}
  #allocation0 [shape = 'u32[]', space=smem, size = 0x4, offset = 0x4, fixed_abs, tag = 'smem constant byte address 0x4 - core index']
  #allocation1 [shape = 'u32[144,128]{1,0:T(1,128)}', space=vmem, size = 0x12000, scoped, tag = 'internal scratch']
  %s0 = inlined_call_operand.vmem [shape: f32[1,12,16,3], index: 0, kind: input, shape index: {}]
  %s1 = inlined_call_operand.vmem [shape: f32[1,864,16,2], index: 1, kind: input, shape index: {}]
  %s2 = inlined_call_operand.vmem [shape: f32[488,128], index: 2, kind: input, shape index: {}]
  %s3 = inlined_call_operand.vmem [shape: f32[16,12], index: 3, kind: output, shape index: {}]
  %s4 = sld [smem:[#allocation0]]
  $region22: #{stditrvirlong01_forward.1} parent=0
    _
  %s6 = ssub.s32 1, %s4
  %s7 = scalar_select 0, %s6, %s4
  // Predicated region
  $region2: #{stditrvirlong01_forward.1} parent=0 // pred_check
    _
  $region3: #{stditrvirlong01_forward.1} parent=0 // pred_check_branch
    %9 = sbr.rel (0) target = $region5
  $region4: #{stditrvirlong01_forward.1} parent=0 // pred_region
    _
  $region5: #{stditrvirlong01_forward.1} parent=0 // pred_fallthru
    _
  // Predicated region
  $region6: #{stditrvirlong01_forward.1} parent=0 // pred_check
    _
  $region7: #{stditrvirlong01_forward.1} parent=0 // pred_check_branch
    %11 = sbr.rel (0) target = $region9
  $region8: #{stditrvirlong01_forward.1} parent=0 // pred_region
    %s12 = scalar_lea.vmem %s1, 13632
  $region9: #{stditrvirlong01_forward.1} parent=0 // pred_fallthru
    _
  // Predicated region
  $region10: #{stditrvirlong01_forward.1} parent=0 // pred_check
    _
  $region11: #{stditrvirlong01_forward.1} parent=0 // pred_check_branch
    %14 = sbr.rel (0) target = $region13
  $region12: #{stditrvirlong01_forward.1} parent=0 // pred_region
    _
  $region13: #{stditrvirlong01_forward.1} parent=0 // pred_fallthru
    _
  %s15 = scalar_lea.vmem %s1, 13632
  %s16 = scalar_lea.vmem %s1, 13632
  %v17 = vld [vmem:[%s16] sm:$0xff]
  %v18 = vld [vmem:[%s16 + $0x8] sm:$0xff]
  %v19 = vld [vmem:[%s16 + $0x10] sm:$0xff]
  %v20 = vld [vmem:[%s16 + $0x18] sm:$0xff]
  %v21 = vld [vmem:[%s16 + $0x20] sm:$0xff]
  %v22 = vld [vmem:[%s16 + $0x28] sm:$0xff]
  %v23 = vld [vmem:[%s16 + $0x30] sm:$0xff]
  %v24 = vld [vmem:[%s16 + $0x38] sm:$0xff]
  %v25 = vld [vmem:[%s16 + $0x40] sm:$0xff]
  %v26 = vld [vmem:[%s16 + $0x48] sm:$0xff]
  %v27 = vld [vmem:[%s16 + $0x50] sm:$0xff]
  %v28 = vld [vmem:[%s16 + $0x58] sm:$0xff]
  %v29 = vld [vmem:[%s16 + $0x60] sm:$0xff]
  %v30 = vld [vmem:[%s16 + $0x68] sm:$0xff]
  %v31 = vld [vmem:[%s16 + $0x70] sm:$0xff]
  %v32 = vld [vmem:[%s16 + $0x78] sm:$0xff]
  %v33 = vld [vmem:[%s16 + $0x80] sm:$0xff]
  %v34 = vld [vmem:[%s16 + $0x88] sm:$0xff]
  %v35 = vld [vmem:[%s16 + $0x90] sm:$0xff]
  %v36 = vld [vmem:[%s16 + $0x98] sm:$0xff]
  %v37 = vld [vmem:[%s16 + $0xa0] sm:$0xff]
  %v38 = vld [vmem:[%s16 + $0xa8] sm:$0xff]
  %v39 = vld [vmem:[%s16 + $0xb0] sm:$0xff]
  %v40 = vld [vmem:[%s16 + $0xb8] sm:$0xff]
  %65 = vset.pattern.permute.xlu0 0
  %66 = vperm.xlu0 %65, %v17
  %v67 = vpop.permute.xlu0 %66
  %68 = vset.pattern.permute.xlu0 0
  %69 = vperm.xlu0 %68, %v18
  %v70 = vpop.permute.xlu0 %69
  %71 = vset.pattern.permute.xlu0 0
  %72 = vperm.xlu0 %71, %v19
  %v73 = vpop.permute.xlu0 %72
  %74 = vset.pattern.permute.xlu0 0
  %75 = vperm.xlu0 %74, %v20
  %v76 = vpop.permute.xlu0 %75
  %77 = vset.pattern.permute.xlu0 0
  %78 = vperm.xlu0 %77, %v21
  %v79 = vpop.permute.xlu0 %78
  %80 = vset.pattern.permute.xlu0 0
  %81 = vperm.xlu0 %80, %v22
  %v82 = vpop.permute.xlu0 %81
  %83 = vset.pattern.permute.xlu0 0
  %84 = vperm.xlu0 %83, %v23
  %v85 = vpop.permute.xlu0 %84
  %86 = vset.pattern.permute.xlu0 0
  %87 = vperm.xlu0 %86, %v24
  %v88 = vpop.permute.xlu0 %87
  %89 = vset.pattern.permute.xlu0 0
  %90 = vperm.xlu0 %89, %v25
  %v91 = vpop.permute.xlu0 %90
  %92 = vset.pattern.permute.xlu0 0
  %93 = vperm.xlu0 %92, %v26
  %v94 = vpop.permute.xlu0 %93
  %95 = vset.pattern.permute.xlu0 0
  %96 = vperm.xlu0 %95, %v27
  %v97 = vpop.permute.xlu0 %96
  %98 = vset.pattern.permute.xlu0 0
  %99 = vperm.xlu0 %98, %v28
  %v100 = vpop.permute.xlu0 %99
  %101 = vset.pattern.permute.xlu0 0
  %102 = vperm.xlu0 %101, %v29
  %v103 = vpop.permute.xlu0 %102
  %104 = vset.pattern.permute.xlu0 0
  %105 = vperm.xlu0 %104, %v30
  %v106 = vpop.permute.xlu0 %105
  %107 = vset.pattern.permute.xlu0 0
  %108 = vperm.xlu0 %107, %v31
  %v109 = vpop.permute.xlu0 %108
  %110 = vset.pattern.permute.xlu0 0
  %111 = vperm.xlu0 %110, %v32
  %v112 = vpop.permute.xlu0 %111
  %113 = vset.pattern.permute.xlu0 0
  %114 = vperm.xlu0 %113, %v33
  %v115 = vpop.permute.xlu0 %114
  %116 = vset.pattern.permute.xlu0 0
  %117 = vperm.xlu0 %116, %v34
  %v118 = vpop.permute.xlu0 %117
  %119 = vset.pattern.permute.xlu0 0
  %120 = vperm.xlu0 %119, %v35
  %v121 = vpop.permute.xlu0 %120
  %122 = vset.pattern.permute.xlu0 0
  %123 = vperm.xlu0 %122, %v36
  %v124 = vpop.permute.xlu0 %123
  %125 = vset.pattern.permute.xlu0 0
  %126 = vperm.xlu0 %125, %v37
  %v127 = vpop.permute.xlu0 %126
  %128 = vset.pattern.permute.xlu0 0
  %129 = vperm.xlu0 %128, %v38
  %v130 = vpop.permute.xlu0 %129
  %131 = vset.pattern.permute.xlu0 0
  %132 = vperm.xlu0 %131, %v39
  %v133 = vpop.permute.xlu0 %132
  %134 = vset.pattern.permute.xlu0 0
  %135 = vperm.xlu0 %134, %v40
  %v136 = vpop.permute.xlu0 %135
  %v137 = vlaneseq
  %v138 = vand.u32 %v137, 127
  %v139 = vlaneseq
  %v140 = vshrl.u32 %v139, 7
  %v141 = vsub.s32 %v138, %v140
  %v142 = vrot.slane %v67, %v141
  %v143 = vadd.s32 %v138, 4294967288
  %v144 = vlaneseq
  %v145 = vshrl.u32 %v144, 7
  %v146 = vsub.s32 %v143, %v145
  %v147 = vrot.slane %v70, %v146
  %vm148 = vcmask 130112
  %v149 = vsel %vm148, %v147, %v142
  %v150 = vlaneseq
  %v151 = vshrl.u32 %v150, 7
  %v152 = vsub.s32 %v138, %v151
  %v153 = vrot.slane %v73, %v152
  %v154 = vlaneseq
  %v155 = vshrl.u32 %v154, 7
  %v156 = vsub.s32 %v143, %v155
  %v157 = vrot.slane %v76, %v156
  %v158 = vsel %vm148, %v157, %v153
  %v159 = vlaneseq
  %v160 = vshrl.u32 %v159, 7
  %v161 = vsub.s32 %v138, %v160
  %v162 = vrot.slane %v79, %v161
  %v163 = vlaneseq
  %v164 = vshrl.u32 %v163, 7
  %v165 = vsub.s32 %v143, %v164
  %v166 = vrot.slane %v82, %v165
  %v167 = vsel %vm148, %v166, %v162
  %v168 = vlaneseq
  %v169 = vshrl.u32 %v168, 7
  %v170 = vsub.s32 %v138, %v169
  %v171 = vrot.slane %v85, %v170
  %v172 = vlaneseq
  %v173 = vshrl.u32 %v172, 7
  %v174 = vsub.s32 %v143, %v173
  %v175 = vrot.slane %v88, %v174
  %v176 = vsel %vm148, %v175, %v171
  %v177 = vlaneseq
  %v178 = vshrl.u32 %v177, 7
  %v179 = vsub.s32 %v138, %v178
  %v180 = vrot.slane %v91, %v179
  %v181 = vlaneseq
  %v182 = vshrl.u32 %v181, 7
  %v183 = vsub.s32 %v143, %v182
  %v184 = vrot.slane %v94, %v183
  %v185 = vsel %vm148, %v184, %v180
  %v186 = vlaneseq
  %v187 = vshrl.u32 %v186, 7
  %v188 = vsub.s32 %v138, %v187
  %v189 = vrot.slane %v97, %v188
  %v190 = vlaneseq
  %v191 = vshrl.u32 %v190, 7
  %v192 = vsub.s32 %v143, %v191
  %v193 = vrot.slane %v100, %v192
  %v194 = vsel %vm148, %v193, %v189
  %v195 = vlaneseq
  %v196 = vshrl.u32 %v195, 7
  %v197 = vsub.s32 %v138, %v196
  %v198 = vrot.slane %v103, %v197
  %v199 = vlaneseq
  %v200 = vshrl.u32 %v199, 7
  %v201 = vsub.s32 %v143, %v200
  %v202 = vrot.slane %v106, %v201
  %v203 = vsel %vm148, %v202, %v198
  %v204 = vlaneseq
  %v205 = vshrl.u32 %v204, 7
  %v206 = vsub.s32 %v138, %v205
  %v207 = vrot.slane %v109, %v206
  %v208 = vlaneseq
  %v209 = vshrl.u32 %v208, 7
  %v210 = vsub.s32 %v143, %v209
  %v211 = vrot.slane %v112, %v210
  %v212 = vsel %vm148, %v211, %v207
  %v213 = vlaneseq
  %v214 = vshrl.u32 %v213, 7
  %v215 = vsub.s32 %v138, %v214
  %v216 = vrot.slane %v115, %v215
  %v217 = vlaneseq
  %v218 = vshrl.u32 %v217, 7
  %v219 = vsub.s32 %v143, %v218
  %v220 = vrot.slane %v118, %v219
  %v221 = vsel %vm148, %v220, %v216
  %v222 = vlaneseq
  %v223 = vshrl.u32 %v222, 7
  %v224 = vsub.s32 %v138, %v223
  %v225 = vrot.slane %v121, %v224
  %v226 = vlaneseq
  %v227 = vshrl.u32 %v226, 7
  %v228 = vsub.s32 %v143, %v227
  %v229 = vrot.slane %v124, %v228
  %v230 = vsel %vm148, %v229, %v225
  %v231 = vlaneseq
  %v232 = vshrl.u32 %v231, 7
  %v233 = vsub.s32 %v138, %v232
  %v234 = vrot.slane %v127, %v233
  %v235 = vlaneseq
  %v236 = vshrl.u32 %v235, 7
  %v237 = vsub.s32 %v143, %v236
  %v238 = vrot.slane %v130, %v237
  %v239 = vsel %vm148, %v238, %v234
  %v240 = vlaneseq
  %v241 = vshrl.u32 %v240, 7
  %v242 = vsub.s32 %v138, %v241
  %v243 = vrot.slane %v133, %v242
  %v244 = vlaneseq
  %v245 = vshrl.u32 %v244, 7
  %v246 = vsub.s32 %v143, %v245
  %v247 = vrot.slane %v136, %v246
  %v248 = vsel %vm148, %v247, %v243
  %vm249 = vcmask 1041409
  %v250 = vsel %vm249, %v158, %v149
  %vm251 = vcmask 1042434
  %v252 = vsel %vm251, %v167, %v250
  %vm253 = vcmask 1043459
  %v254 = vsel %vm253, %v176, %v252
  %vm255 = vcmask 1044484
  %v256 = vsel %vm255, %v185, %v254
  %vm257 = vcmask 1045509
  %v258 = vsel %vm257, %v194, %v256
  %vm259 = vcmask 1046534
  %v260 = vsel %vm259, %v203, %v258
  %vm261 = vcmask 1047559
  %v262 = vsel %vm261, %v212, %v260
  %v263 = vsel %vm249, %v230, %v221
  %v264 = vsel %vm251, %v239, %v263
  %v265 = vsel %vm253, %v248, %v264
  %vm268 = vcmask 1043456
  %v269 = vsel %vm268, %v265, 1.0
  %v270 = vld [vmem:[%s2] sm:$0xff]
  %v271 = vld [vmem:[%s2 + $0x8] sm:$0x1f]
  %272 = vxpose.xlu0.b32.start [1/16] %v262, 128
  %273 = vxpose.xlu0.b32.cont [2/16] %v269, 128
  %274 = vxpose.xlu0.b32.cont [3/16] 0.0, 128
  %275 = vxpose.xlu0.b32.cont [4/16] 0.0, 128
  %276 = vxpose.xlu0.b32.cont [5/16] 0.0, 128
  %277 = vxpose.xlu0.b32.cont [6/16] 0.0, 128
  %278 = vxpose.xlu0.b32.cont [7/16] 0.0, 128
  %279 = vxpose.xlu0.b32.cont [8/16] 0.0, 128
  %280 = vxpose.xlu0.b32.cont [9/16] 0.0, 128
  %281 = vxpose.xlu0.b32.cont [10/16] 0.0, 128
  %282 = vxpose.xlu0.b32.cont [11/16] 0.0, 128
  %283 = vxpose.xlu0.b32.cont [12/16] 0.0, 128
  %284 = vxpose.xlu0.b32.cont [13/16] 0.0, 128
  %285 = vxpose.xlu0.b32.cont [14/16] 0.0, 128
  %286 = vxpose.xlu0.b32.cont [15/16] 0.0, 128
  %287 = vxpose.xlu0.b32.end [16/16] 0.0, 128
  %v288 = vpop.trf.xlu0
  %v289 = vpop.trf.xlu0
  %v290 = vpop.trf.xlu0
  %v291 = vpop.trf.xlu0
  %v292 = vpop.trf.xlu0
  %v293 = vpop.trf.xlu0
  %v294 = vpop.trf.xlu0
  %v295 = vpop.trf.xlu0
  %v296 = vpop.trf.xlu0
  %v297 = vpop.trf.xlu0
  %v298 = vpop.trf.xlu0
  %v299 = vpop.trf.xlu0
  %v300 = vpop.trf.xlu0
  %v301 = vpop.trf.xlu0
  %v302 = vpop.trf.xlu0
  %v303 = vpop.trf.xlu0
  %vm304 = vcmask 105472
  %v306 = vsel %vm304, %v288, 0
  %v309 = vsel %vm304, %v289, 0
  %vm311 = vcmask 1044480
  %v313 = vsel %vm311, %v271, 0
  %315 = vmatprep.subr.mxu0 0.0
  %316 = vmatpush1.msra.mxu0 %v270
  %317 = vmatprep.subr.mxu0 0.0
  %318 = vmatpush1.msra.mxu0 %v313
  %319 = vmatprep.subr.mxu0 0.0
  %320 = vmatpush1.msra.mxu0 0.0
  %321 = vmatprep.subr.mxu0 0.0
  %322 = vmatpush1.msra.mxu0 0.0
  %323 = vmatprep.subr.mxu0 0.0
  %324 = vmatpush1.msra.mxu0 0.0
  %325 = vmatprep.subr.mxu0 0.0
  %326 = vmatpush1.msra.mxu0 0.0
  %327 = vmatprep.subr.mxu0 0.0
  %328 = vmatpush1.msra.mxu0 0.0
  %329 = vmatprep.subr.mxu0 0.0
  %330 = vmatpush1.msra.mxu0 0.0
  %331 = vmatprep.subr.mxu0 0.0
  %332 = vmatpush1.msra.mxu0 0.0
  %333 = vmatprep.subr.mxu0 0.0
  %334 = vmatpush1.msra.mxu0 0.0
  %335 = vmatprep.subr.mxu0 0.0
  %336 = vmatpush1.msra.mxu0 0.0
  %337 = vmatprep.subr.mxu0 0.0
  %338 = vmatpush1.msra.mxu0 0.0
  %339 = vmatprep.subr.mxu0 0.0
  %340 = vmatpush1.msra.mxu0 0.0
  %341 = vmatprep.subr.mxu0 0.0
  %342 = vmatpush1.msra.mxu0 0.0
  %343 = vmatprep.subr.mxu0 0.0
  %344 = vmatpush1.msra.mxu0 0.0
  %345 = vmatprep.subr.mxu0 0.0
  %346 = vmatpush1.msra.mxu0 0.0
  %347 = vmatprep.subr.mxu0 0.0
  %348 = vmatpush1.msra.mxu0 0.0
  %349 = vmatprep.subr.mxu0 0.0
  %350 = vmatpush1.msra.mxu0 0.0
  %351 = vmatprep.subr.mxu0 0.0
  %352 = vmatpush1.msra.mxu0 0.0
  %353 = vmatprep.subr.mxu0 0.0
  %354 = vmatpush1.msra.mxu0 0.0
  %355 = vmatprep.subr.mxu0 0.0
  %356 = vmatpush1.msra.mxu0 0.0
  %357 = vmatprep.subr.mxu0 0.0
  %358 = vmatpush1.msra.mxu0 0.0
  %359 = vmatprep.subr.mxu0 0.0
  %360 = vmatpush1.msra.mxu0 0.0
  %361 = vmatprep.subr.mxu0 0.0
  %362 = vmatpush1.msra.mxu0 0.0
  %363 = vmatprep.subr.mxu0 0.0
  %364 = vmatpush1.msra.mxu0 0.0
  %365 = vmatprep.subr.mxu0 0.0
  %366 = vmatpush1.msra.mxu0 0.0
  %367 = vmatprep.subr.mxu0 0.0
  %368 = vmatpush1.msra.mxu0 0.0
  %369 = vmatprep.subr.mxu0 0.0
  %370 = vmatpush1.msra.mxu0 0.0
  %371 = vmatprep.subr.mxu0 0.0
  %372 = vmatpush1.msra.mxu0 0.0
  %373 = vmatprep.subr.mxu0 0.0
  %374 = vmatpush1.msra.mxu0 0.0
  %375 = vmatprep.subr.mxu0 0.0
  %376 = vmatpush1.msra.mxu0 0.0
  %377 = vmatprep.subr.mxu0 0.0
  %378 = vmatpush1.msra.mxu0 0.0
  %379 = vmatprep.mubr.f32.mxu0 0.0
  %380 = vmatmul.mubr.f32.gmra.mrb[0].mxu0 %v306
  %v381 = vpop.f32.mrb[0].mxu0
  %v382 = vadd.f32 0.0, %v381
  %v383 = vpop.f32.mrb[0].mxu0
  %384 = vmatprep.mubr.f32.mxu0 0.0
  %385 = vmatmul.mubr.f32.gmra.mrb[0].mxu0 %v309
  %v386 = vpop.f32.mrb[0].mxu0
  %v387 = vadd.f32 0.0, %v386
  %v388 = vpop.f32.mrb[0].mxu0
  %389 = vdwg.mxu0
  %v390 = vmax.f32 %v382, 0.0
  %v391 = vmax.f32 %v387, 0.0
  %v392 = vld [vmem:[%s2 + $0x10] sm:$0xff]
  %v393 = vld [vmem:[%s2 + $0x18] sm:$0xff]
  %v394 = vld [vmem:[%s2 + $0x20] sm:$0xff]
  %v395 = vld [vmem:[%s2 + $0x28] sm:$0xff]
  %v396 = vld [vmem:[%s2 + $0x30] sm:$0xff]
  %v397 = vld [vmem:[%s2 + $0x38] sm:$0xff]
  %v398 = vld [vmem:[%s2 + $0x40] sm:$0xff]
  %v399 = vld [vmem:[%s2 + $0x48] sm:$0xff]
  %v400 = vld [vmem:[%s2 + $0x50] sm:$0x1]
  %vm401 = vcmask 523264
  %v402 = vsel %vm401, %v390, 1.0
  %v403 = vsel %vm401, %v391, 1.0
  %vm404 = vcmask 531456
  %v406 = vsel %vm404, %v402, 0
  %v409 = vsel %vm404, %v403, 0
  %vm411 = vcmask 1040384
  %v413 = vsel %vm411, %v400, 0
  %415 = vmatprep.subr.mxu0 0.0
  %416 = vmatpush1.msra.mxu0 %v392
  %417 = vmatprep.subr.mxu0 0.0
  %418 = vmatpush1.msra.mxu0 %v393
  %419 = vmatprep.subr.mxu0 0.0
  %420 = vmatpush1.msra.mxu0 %v394
  %421 = vmatprep.subr.mxu0 0.0
  %422 = vmatpush1.msra.mxu0 %v395
  %423 = vmatprep.subr.mxu0 0.0
  %424 = vmatpush1.msra.mxu0 %v396
  %425 = vmatprep.subr.mxu0 0.0
  %426 = vmatpush1.msra.mxu0 %v397
  %427 = vmatprep.subr.mxu0 0.0
  %428 = vmatpush1.msra.mxu0 %v398
  %429 = vmatprep.subr.mxu0 0.0
  %430 = vmatpush1.msra.mxu0 %v399
  %431 = vmatprep.subr.mxu0 0.0
  %432 = vmatpush1.msra.mxu0 %v413
  %433 = vmatprep.subr.mxu0 0.0
  %434 = vmatpush1.msra.mxu0 0.0
  %435 = vmatprep.subr.mxu0 0.0
  %436 = vmatpush1.msra.mxu0 0.0
  %437 = vmatprep.subr.mxu0 0.0
  %438 = vmatpush1.msra.mxu0 0.0
  %439 = vmatprep.subr.mxu0 0.0
  %440 = vmatpush1.msra.mxu0 0.0
  %441 = vmatprep.subr.mxu0 0.0
  %442 = vmatpush1.msra.mxu0 0.0
  %443 = vmatprep.subr.mxu0 0.0
  %444 = vmatpush1.msra.mxu0 0.0
  %445 = vmatprep.subr.mxu0 0.0
  %446 = vmatpush1.msra.mxu0 0.0
  %447 = vmatprep.subr.mxu0 0.0
  %448 = vmatpush1.msra.mxu0 0.0
  %449 = vmatprep.subr.mxu0 0.0
  %450 = vmatpush1.msra.mxu0 0.0
  %451 = vmatprep.subr.mxu0 0.0
  %452 = vmatpush1.msra.mxu0 0.0
  %453 = vmatprep.subr.mxu0 0.0
  %454 = vmatpush1.msra.mxu0 0.0
  %455 = vmatprep.subr.mxu0 0.0
  %456 = vmatpush1.msra.mxu0 0.0
  %457 = vmatprep.subr.mxu0 0.0
  %458 = vmatpush1.msra.mxu0 0.0
  %459 = vmatprep.subr.mxu0 0.0
  %460 = vmatpush1.msra.mxu0 0.0
  %461 = vmatprep.subr.mxu0 0.0
  %462 = vmatpush1.msra.mxu0 0.0
  %463 = vmatprep.subr.mxu0 0.0
  %464 = vmatpush1.msra.mxu0 0.0
  %465 = vmatprep.subr.mxu0 0.0
  %466 = vmatpush1.msra.mxu0 0.0
  %467 = vmatprep.subr.mxu0 0.0
  %468 = vmatpush1.msra.mxu0 0.0
  %469 = vmatprep.subr.mxu0 0.0
  %470 = vmatpush1.msra.mxu0 0.0
  %471 = vmatprep.subr.mxu0 0.0
  %472 = vmatpush1.msra.mxu0 0.0
  %473 = vmatprep.subr.mxu0 0.0
  %474 = vmatpush1.msra.mxu0 0.0
  %475 = vmatprep.subr.mxu0 0.0
  %476 = vmatpush1.msra.mxu0 0.0
  %477 = vmatprep.subr.mxu0 0.0
  %478 = vmatpush1.msra.mxu0 0.0
  %479 = vmatprep.mubr.f32.mxu0 0.0
  %480 = vmatmul.mubr.f32.gmra.mrb[0].mxu0 %v406
  %v481 = vpop.f32.mrb[0].mxu0
  %v482 = vadd.f32 0.0, %v481
  %v483 = vpop.f32.mrb[0].mxu0
  %484 = vmatprep.mubr.f32.mxu0 0.0
  %485 = vmatmul.mubr.f32.gmra.mrb[0].mxu0 %v409
  %v486 = vpop.f32.mrb[0].mxu0
  %v487 = vadd.f32 0.0, %v486
  %v488 = vpop.f32.mrb[0].mxu0
  %489 = vdwg.mxu0
  %v490 = vmax.f32 %v482, 0.0
  %v491 = vmax.f32 %v487, 0.0
  %v492 = vld [vmem:[%s2 + $0x58] sm:$0xff]
  %v493 = vld [vmem:[%s2 + $0x60] sm:$0xff]
  %v494 = vld [vmem:[%s2 + $0x68] sm:$0xff]
  %v495 = vld [vmem:[%s2 + $0x70] sm:$0xff]
  %v496 = vld [vmem:[%s2 + $0x78] sm:$0xff]
  %v497 = vld [vmem:[%s2 + $0x80] sm:$0xff]
  %v498 = vld [vmem:[%s2 + $0x88] sm:$0xff]
  %v499 = vld [vmem:[%s2 + $0x90] sm:$0xff]
  %v500 = vld [vmem:[%s2 + $0x98] sm:$0xff]
  %v501 = vld [vmem:[%s2 + $0xa0] sm:$0xff]
  %v502 = vld [vmem:[%s2 + $0xa8] sm:$0xff]
  %v503 = vld [vmem:[%s2 + $0xb0] sm:$0xff]
  %v504 = vld [vmem:[%s2 + $0xb8] sm:$0xff]
  %v505 = vld [vmem:[%s2 + $0xc0] sm:$0xff]
  %v506 = vld [vmem:[%s2 + $0xc8] sm:$0xff]
  %v507 = vld [vmem:[%s2 + $0xd0] sm:$0xff]
  %v508 = vld [vmem:[%s2 + $0xd8] sm:$0x1]
  %vm509 = vcmask 7168
  %v511 = vsel %vm509, 1.0, 0
  %v514 = vsel %vm411, %v508, 0
  %516 = vmatprep.subr.mxu0 0.0
  %517 = vmatpush1.msra.mxu0 %v492
  %518 = vmatprep.subr.mxu0 0.0
  %519 = vmatpush1.msra.mxu0 %v493
  %520 = vmatprep.subr.mxu0 0.0
  %521 = vmatpush1.msra.mxu0 %v494
  %522 = vmatprep.subr.mxu0 0.0
  %523 = vmatpush1.msra.mxu0 %v495
  %524 = vmatprep.subr.mxu0 0.0
  %525 = vmatpush1.msra.mxu0 %v496
  %526 = vmatprep.subr.mxu0 0.0
  %527 = vmatpush1.msra.mxu0 %v497
  %528 = vmatprep.subr.mxu0 0.0
  %529 = vmatpush1.msra.mxu0 %v498
  %530 = vmatprep.subr.mxu0 0.0
  %531 = vmatpush1.msra.mxu0 %v499
  %532 = vmatprep.subr.mxu0 0.0
  %533 = vmatpush1.msra.mxu0 %v500
  %534 = vmatprep.subr.mxu0 0.0
  %535 = vmatpush1.msra.mxu0 %v501
  %536 = vmatprep.subr.mxu0 0.0
  %537 = vmatpush1.msra.mxu0 %v502
  %538 = vmatprep.subr.mxu0 0.0
  %539 = vmatpush1.msra.mxu0 %v503
  %540 = vmatprep.subr.mxu0 0.0
  %541 = vmatpush1.msra.mxu0 %v504
  %542 = vmatprep.subr.mxu0 0.0
  %543 = vmatpush1.msra.mxu0 %v505
  %544 = vmatprep.subr.mxu0 0.0
  %545 = vmatpush1.msra.mxu0 %v506
  %546 = vmatprep.subr.mxu0 0.0
  %547 = vmatpush1.msra.mxu0 %v507
  %548 = vmatprep.subr.mxu0 0.0
  %549 = vmatpush1.msra.mxu0 %v514
  %550 = vmatprep.subr.mxu0 0.0
  %551 = vmatpush1.msra.mxu0 0.0
  %552 = vmatprep.subr.mxu0 0.0
  %553 = vmatpush1.msra.mxu0 0.0
  %554 = vmatprep.subr.mxu0 0.0
  %555 = vmatpush1.msra.mxu0 0.0
  %556 = vmatprep.subr.mxu0 0.0
  %557 = vmatpush1.msra.mxu0 0.0
  %558 = vmatprep.subr.mxu0 0.0
  %559 = vmatpush1.msra.mxu0 0.0
  %560 = vmatprep.subr.mxu0 0.0
  %561 = vmatpush1.msra.mxu0 0.0
  %562 = vmatprep.subr.mxu0 0.0
  %563 = vmatpush1.msra.mxu0 0.0
  %564 = vmatprep.subr.mxu0 0.0
  %565 = vmatpush1.msra.mxu0 0.0
  %566 = vmatprep.subr.mxu0 0.0
  %567 = vmatpush1.msra.mxu0 0.0
  %568 = vmatprep.subr.mxu0 0.0
  %569 = vmatpush1.msra.mxu0 0.0
  %570 = vmatprep.subr.mxu0 0.0
  %571 = vmatpush1.msra.mxu0 0.0
  %572 = vmatprep.subr.mxu0 0.0
  %573 = vmatpush1.msra.mxu0 0.0
  %574 = vmatprep.subr.mxu0 0.0
  %575 = vmatpush1.msra.mxu0 0.0
  %576 = vmatprep.subr.mxu0 0.0
  %577 = vmatpush1.msra.mxu0 0.0
  %578 = vmatprep.subr.mxu0 0.0
  %579 = vmatpush1.msra.mxu0 0.0
  %580 = vmatprep.mubr.f32.mxu0 %v511
  %581 = vmatmul.mubr.f32.gmra.mrb[0].mxu0 %v490
  %v582 = vpop.f32.mrb[0].mxu0
  %v583 = vadd.f32 %v390, %v582
  %v584 = vpop.f32.mrb[0].mxu0
  %585 = vmatprep.mubr.f32.mxu0 %v511
  %586 = vmatmul.mubr.f32.gmra.mrb[0].mxu0 %v491
  %v587 = vpop.f32.mrb[0].mxu0
  %v588 = vadd.f32 %v391, %v587
  %v589 = vpop.f32.mrb[0].mxu0
  %590 = vdwg.mxu0
  %v591 = vld [vmem:[%s2 + $0x110] sm:$0xff]
  %v592 = vld [vmem:[%s2 + $0x118] sm:$0xff]
  %v593 = vld [vmem:[%s2 + $0x120] sm:$0xff]
  %v594 = vld [vmem:[%s2 + $0x128] sm:$0xff]
  %v595 = vld [vmem:[%s2 + $0x130] sm:$0xff]
  %v596 = vld [vmem:[%s2 + $0x138] sm:$0xff]
  %v597 = vld [vmem:[%s2 + $0x140] sm:$0xff]
  %v598 = vld [vmem:[%s2 + $0x148] sm:$0xff]
  %v599 = vld [vmem:[%s2 + $0x150] sm:$0x1]
  %v600 = vsel %vm401, %v583, 1.0
  %v601 = vsel %vm401, %v588, 1.0
  %v602 = vld [vmem:[%s2 + $0xe0] sm:$0xff]
  %v603 = vld [vmem:[%s2 + $0xe8] sm:$0xf]
  %v604 = vld [vmem:[%s0] sm:$0xff]
  %v605 = vld [vmem:[%s0 + $0x8] sm:$0xff]
  %v606 = vld [vmem:[%s0 + $0x10] sm:$0xff]
  %v607 = vld [vmem:[%s0 + $0x18] sm:$0xff]
  %v608 = vld [vmem:[%s0 + $0x20] sm:$0xff]
  %v609 = vld [vmem:[%s0 + $0x28] sm:$0xff]
  %v610 = vld [vmem:[%s0 + $0x30] sm:$0xff]
  %v611 = vld [vmem:[%s0 + $0x38] sm:$0xff]
  %v612 = vld [vmem:[%s0 + $0x40] sm:$0xff]
  %v613 = vld [vmem:[%s0 + $0x48] sm:$0xff]
  %v614 = vld [vmem:[%s0 + $0x50] sm:$0xff]
  %v615 = vld [vmem:[%s0 + $0x58] sm:$0xff]
  %v616 = vld [vmem:[%s0 + $0x60] sm:$0xff]
  %v617 = vld [vmem:[%s0 + $0x68] sm:$0xff]
  %v618 = vld [vmem:[%s0 + $0x70] sm:$0xff]
  %v619 = vld [vmem:[%s0 + $0x78] sm:$0xff]
  %v620 = vld [vmem:[%s0 + $0x80] sm:$0xff]
  %v621 = vld [vmem:[%s0 + $0x88] sm:$0xff]
  %v622 = vld [vmem:[%s0 + $0x90] sm:$0xff]
  %v623 = vld [vmem:[%s0 + $0x98] sm:$0xff]
  %v624 = vld [vmem:[%s0 + $0xa0] sm:$0xff]
  %v625 = vld [vmem:[%s0 + $0xa8] sm:$0xff]
  %v626 = vld [vmem:[%s0 + $0xb0] sm:$0xff]
  %v627 = vld [vmem:[%s0 + $0xb8] sm:$0xff]
  %652 = vset.pattern.permute.xlu0 0
  %653 = vperm.xlu0 %652, %v604
  %v654 = vpop.permute.xlu0 %653
  %655 = vset.pattern.permute.xlu0 0
  %656 = vperm.xlu0 %655, %v605
  %v657 = vpop.permute.xlu0 %656
  %658 = vset.pattern.permute.xlu0 0
  %659 = vperm.xlu0 %658, %v606
  %v660 = vpop.permute.xlu0 %659
  %661 = vset.pattern.permute.xlu0 0
  %662 = vperm.xlu0 %661, %v607
  %v663 = vpop.permute.xlu0 %662
  %664 = vset.pattern.permute.xlu0 0
  %665 = vperm.xlu0 %664, %v608
  %v666 = vpop.permute.xlu0 %665
  %667 = vset.pattern.permute.xlu0 0
  %668 = vperm.xlu0 %667, %v609
  %v669 = vpop.permute.xlu0 %668
  %670 = vset.pattern.permute.xlu0 0
  %671 = vperm.xlu0 %670, %v610
  %v672 = vpop.permute.xlu0 %671
  %673 = vset.pattern.permute.xlu0 0
  %674 = vperm.xlu0 %673, %v611
  %v675 = vpop.permute.xlu0 %674
  %676 = vset.pattern.permute.xlu0 0
  %677 = vperm.xlu0 %676, %v612
  %v678 = vpop.permute.xlu0 %677
  %679 = vset.pattern.permute.xlu0 0
  %680 = vperm.xlu0 %679, %v613
  %v681 = vpop.permute.xlu0 %680
  %682 = vset.pattern.permute.xlu0 0
  %683 = vperm.xlu0 %682, %v614
  %v684 = vpop.permute.xlu0 %683
  %685 = vset.pattern.permute.xlu0 0
  %686 = vperm.xlu0 %685, %v615
  %v687 = vpop.permute.xlu0 %686
  %688 = vset.pattern.permute.xlu0 0
  %689 = vperm.xlu0 %688, %v616
  %v690 = vpop.permute.xlu0 %689
  %691 = vset.pattern.permute.xlu0 0
  %692 = vperm.xlu0 %691, %v617
  %v693 = vpop.permute.xlu0 %692
  %694 = vset.pattern.permute.xlu0 0
  %695 = vperm.xlu0 %694, %v618
  %v696 = vpop.permute.xlu0 %695
  %697 = vset.pattern.permute.xlu0 0
  %698 = vperm.xlu0 %697, %v619
  %v699 = vpop.permute.xlu0 %698
  %700 = vset.pattern.permute.xlu0 0
  %701 = vperm.xlu0 %700, %v620
  %v702 = vpop.permute.xlu0 %701
  %703 = vset.pattern.permute.xlu0 0
  %704 = vperm.xlu0 %703, %v621
  %v705 = vpop.permute.xlu0 %704
  %706 = vset.pattern.permute.xlu0 0
  %707 = vperm.xlu0 %706, %v622
  %v708 = vpop.permute.xlu0 %707
  %709 = vset.pattern.permute.xlu0 0
  %710 = vperm.xlu0 %709, %v623
  %v711 = vpop.permute.xlu0 %710
  %712 = vset.pattern.permute.xlu0 0
  %713 = vperm.xlu0 %712, %v624
  %v714 = vpop.permute.xlu0 %713
  %715 = vset.pattern.permute.xlu0 0
  %716 = vperm.xlu0 %715, %v625
  %v717 = vpop.permute.xlu0 %716
  %718 = vset.pattern.permute.xlu0 0
  %719 = vperm.xlu0 %718, %v626
  %v720 = vpop.permute.xlu0 %719
  %721 = vset.pattern.permute.xlu0 0
  %722 = vperm.xlu0 %721, %v627
  %v723 = vpop.permute.xlu0 %722
  %v724 = vlaneseq
  %v725 = vshrl.u32 %v724, 7
  %v726 = vsub.s32 %v138, %v725
  %v727 = vrot.slane %v654, %v726
  %v728 = vlaneseq
  %v729 = vshrl.u32 %v728, 7
  %v730 = vsub.s32 %v143, %v729
  %v731 = vrot.slane %v657, %v730
  %v732 = vsel %vm148, %v731, %v727
  %v733 = vlaneseq
  %v734 = vshrl.u32 %v733, 7
  %v735 = vsub.s32 %v138, %v734
  %v736 = vrot.slane %v660, %v735
  %v737 = vlaneseq
  %v738 = vshrl.u32 %v737, 7
  %v739 = vsub.s32 %v143, %v738
  %v740 = vrot.slane %v663, %v739
  %v741 = vsel %vm148, %v740, %v736
  %v742 = vlaneseq
  %v743 = vshrl.u32 %v742, 7
  %v744 = vsub.s32 %v138, %v743
  %v745 = vrot.slane %v666, %v744
  %v746 = vlaneseq
  %v747 = vshrl.u32 %v746, 7
  %v748 = vsub.s32 %v143, %v747
  %v749 = vrot.slane %v669, %v748
  %v750 = vsel %vm148, %v749, %v745
  %v751 = vlaneseq
  %v752 = vshrl.u32 %v751, 7
  %v753 = vsub.s32 %v138, %v752
  %v754 = vrot.slane %v672, %v753
  %v755 = vlaneseq
  %v756 = vshrl.u32 %v755, 7
  %v757 = vsub.s32 %v143, %v756
  %v758 = vrot.slane %v675, %v757
  %v759 = vsel %vm148, %v758, %v754
  %v760 = vlaneseq
  %v761 = vshrl.u32 %v760, 7
  %v762 = vsub.s32 %v138, %v761
  %v763 = vrot.slane %v678, %v762
  %v764 = vlaneseq
  %v765 = vshrl.u32 %v764, 7
  %v766 = vsub.s32 %v143, %v765
  %v767 = vrot.slane %v681, %v766
  %v768 = vsel %vm148, %v767, %v763
  %v769 = vlaneseq
  %v770 = vshrl.u32 %v769, 7
  %v771 = vsub.s32 %v138, %v770
  %v772 = vrot.slane %v684, %v771
  %v773 = vlaneseq
  %v774 = vshrl.u32 %v773, 7
  %v775 = vsub.s32 %v143, %v774
  %v776 = vrot.slane %v687, %v775
  %v777 = vsel %vm148, %v776, %v772
  %v778 = vlaneseq
  %v779 = vshrl.u32 %v778, 7
  %v780 = vsub.s32 %v138, %v779
  %v781 = vrot.slane %v690, %v780
  %v782 = vlaneseq
  %v783 = vshrl.u32 %v782, 7
  %v784 = vsub.s32 %v143, %v783
  %v785 = vrot.slane %v693, %v784
  %v786 = vsel %vm148, %v785, %v781
  %v787 = vlaneseq
  %v788 = vshrl.u32 %v787, 7
  %v789 = vsub.s32 %v138, %v788
  %v790 = vrot.slane %v696, %v789
  %v791 = vlaneseq
  %v792 = vshrl.u32 %v791, 7
  %v793 = vsub.s32 %v143, %v792
  %v794 = vrot.slane %v699, %v793
  %v795 = vsel %vm148, %v794, %v790
  %v796 = vlaneseq
  %v797 = vshrl.u32 %v796, 7
  %v798 = vsub.s32 %v138, %v797
  %v799 = vrot.slane %v702, %v798
  %v800 = vlaneseq
  %v801 = vshrl.u32 %v800, 7
  %v802 = vsub.s32 %v143, %v801
  %v803 = vrot.slane %v705, %v802
  %v804 = vsel %vm148, %v803, %v799
  %v805 = vlaneseq
  %v806 = vshrl.u32 %v805, 7
  %v807 = vsub.s32 %v138, %v806
  %v808 = vrot.slane %v708, %v807
  %v809 = vlaneseq
  %v810 = vshrl.u32 %v809, 7
  %v811 = vsub.s32 %v143, %v810
  %v812 = vrot.slane %v711, %v811
  %v813 = vsel %vm148, %v812, %v808
  %v814 = vlaneseq
  %v815 = vshrl.u32 %v814, 7
  %v816 = vsub.s32 %v138, %v815
  %v817 = vrot.slane %v714, %v816
  %v818 = vlaneseq
  %v819 = vshrl.u32 %v818, 7
  %v820 = vsub.s32 %v143, %v819
  %v821 = vrot.slane %v717, %v820
  %v822 = vsel %vm148, %v821, %v817
  %v823 = vlaneseq
  %v824 = vshrl.u32 %v823, 7
  %v825 = vsub.s32 %v138, %v824
  %v826 = vrot.slane %v720, %v825
  %v827 = vlaneseq
  %v828 = vshrl.u32 %v827, 7
  %v829 = vsub.s32 %v143, %v828
  %v830 = vrot.slane %v723, %v829
  %v831 = vsel %vm148, %v830, %v826
  %v832 = vsel %vm249, %v741, %v732
  %v833 = vsel %vm251, %v750, %v832
  %v834 = vsel %vm253, %v759, %v833
  %v835 = vsel %vm255, %v768, %v834
  %v836 = vsel %vm257, %v777, %v835
  %v837 = vsel %vm259, %v786, %v836
  %v838 = vsel %vm261, %v795, %v837
  %v839 = vsel %vm249, %v813, %v804
  %v840 = vsel %vm251, %v822, %v839
  %v841 = vsel %vm253, %v831, %v840
  %844 = vxpose.xlu0.b32.start [1/16] %v838, 128
  %845 = vxpose.xlu0.b32.cont [2/16] %v841, 128
  %846 = vxpose.xlu0.b32.cont [3/16] 0.0, 128
  %847 = vxpose.xlu0.b32.cont [4/16] 0.0, 128
  %848 = vxpose.xlu0.b32.cont [5/16] 0.0, 128
  %849 = vxpose.xlu0.b32.cont [6/16] 0.0, 128
  %850 = vxpose.xlu0.b32.cont [7/16] 0.0, 128
  %851 = vxpose.xlu0.b32.cont [8/16] 0.0, 128
  %852 = vxpose.xlu0.b32.cont [9/16] 0.0, 128
  %853 = vxpose.xlu0.b32.cont [10/16] 0.0, 128
  %854 = vxpose.xlu0.b32.cont [11/16] 0.0, 128
  %855 = vxpose.xlu0.b32.cont [12/16] 0.0, 128
  %856 = vxpose.xlu0.b32.cont [13/16] 0.0, 128
  %857 = vxpose.xlu0.b32.cont [14/16] 0.0, 128
  %858 = vxpose.xlu0.b32.cont [15/16] 0.0, 128
  %859 = vxpose.xlu0.b32.end [16/16] 0.0, 128
  %v860 = vpop.trf.xlu0
  %v861 = vpop.trf.xlu0
  %v862 = vpop.trf.xlu0
  %v863 = vpop.trf.xlu0
  %v864 = vpop.trf.xlu0
  %v865 = vpop.trf.xlu0
  %v866 = vpop.trf.xlu0
  %v867 = vpop.trf.xlu0
  %v868 = vpop.trf.xlu0
  %v869 = vpop.trf.xlu0
  %v870 = vpop.trf.xlu0
  %v871 = vpop.trf.xlu0
  %v872 = vpop.trf.xlu0
  %v873 = vpop.trf.xlu0
  %v874 = vpop.trf.xlu0
  %v875 = vpop.trf.xlu0
  %vm876 = vcmask 97280
  %v878 = vsel %vm876, %v860, 0
  %v881 = vsel %vm876, %v861, 0
  %v884 = vsel %vm268, %v603, 0
  %886 = vmatprep.subr.mxu0 0.0
  %887 = vmatpush1.msra.mxu0 %v602
  %888 = vmatprep.subr.mxu0 0.0
  %889 = vmatpush1.msra.mxu0 %v884
  %890 = vmatprep.subr.mxu0 0.0
  %891 = vmatpush1.msra.mxu0 0.0
  %892 = vmatprep.subr.mxu0 0.0
  %893 = vmatpush1.msra.mxu0 0.0
  %894 = vmatprep.subr.mxu0 0.0
  %895 = vmatpush1.msra.mxu0 0.0
  %896 = vmatprep.subr.mxu0 0.0
  %897 = vmatpush1.msra.mxu0 0.0
  %898 = vmatprep.subr.mxu0 0.0
  %899 = vmatpush1.msra.mxu0 0.0
  %900 = vmatprep.subr.mxu0 0.0
  %901 = vmatpush1.msra.mxu0 0.0
  %902 = vmatprep.subr.mxu0 0.0
  %903 = vmatpush1.msra.mxu0 0.0
  %904 = vmatprep.subr.mxu0 0.0
  %905 = vmatpush1.msra.mxu0 0.0
  %906 = vmatprep.subr.mxu0 0.0
  %907 = vmatpush1.msra.mxu0 0.0
  %908 = vmatprep.subr.mxu0 0.0
  %909 = vmatpush1.msra.mxu0 0.0
  %910 = vmatprep.subr.mxu0 0.0
  %911 = vmatpush1.msra.mxu0 0.0
  %912 = vmatprep.subr.mxu0 0.0
  %913 = vmatpush1.msra.mxu0 0.0
  %914 = vmatprep.subr.mxu0 0.0
  %915 = vmatpush1.msra.mxu0 0.0
  %916 = vmatprep.subr.mxu0 0.0
  %917 = vmatpush1.msra.mxu0 0.0
  %918 = vmatprep.subr.mxu0 0.0
  %919 = vmatpush1.msra.mxu0 0.0
  %920 = vmatprep.subr.mxu0 0.0
  %921 = vmatpush1.msra.mxu0 0.0
  %922 = vmatprep.subr.mxu0 0.0
  %923 = vmatpush1.msra.mxu0 0.0
  %924 = vmatprep.subr.mxu0 0.0
  %925 = vmatpush1.msra.mxu0 0.0
  %926 = vmatprep.subr.mxu0 0.0
  %927 = vmatpush1.msra.mxu0 0.0
  %928 = vmatprep.subr.mxu0 0.0
  %929 = vmatpush1.msra.mxu0 0.0
  %930 = vmatprep.subr.mxu0 0.0
  %931 = vmatpush1.msra.mxu0 0.0
  %932 = vmatprep.subr.mxu0 0.0
  %933 = vmatpush1.msra.mxu0 0.0
  %934 = vmatprep.subr.mxu0 0.0
  %935 = vmatpush1.msra.mxu0 0.0
  %936 = vmatprep.subr.mxu0 0.0
  %937 = vmatpush1.msra.mxu0 0.0
  %938 = vmatprep.subr.mxu0 0.0
  %939 = vmatpush1.msra.mxu0 0.0
  %940 = vmatprep.subr.mxu0 0.0
  %941 = vmatpush1.msra.mxu0 0.0
  %942 = vmatprep.subr.mxu0 0.0
  %943 = vmatpush1.msra.mxu0 0.0
  %944 = vmatprep.subr.mxu0 0.0
  %945 = vmatpush1.msra.mxu0 0.0
  %946 = vmatprep.subr.mxu0 0.0
  %947 = vmatpush1.msra.mxu0 0.0
  %948 = vmatprep.subr.mxu0 0.0
  %949 = vmatpush1.msra.mxu0 0.0
  %950 = vmatprep.mubr.f32.mxu0 0.0
  %951 = vmatmul.mubr.f32.gmra.mrb[0].mxu0 %v878
  %v952 = vpop.f32.mrb[0].mxu0
  %v953 = vadd.f32 0.0, %v952
  %v954 = vpop.f32.mrb[0].mxu0
  %955 = vmatprep.mubr.f32.mxu0 0.0
  %956 = vmatmul.mubr.f32.gmra.mrb[0].mxu0 %v881
  %v957 = vpop.f32.mrb[0].mxu0
  %v958 = vadd.f32 0.0, %v957
  %v959 = vpop.f32.mrb[0].mxu0
  %960 = vdwg.mxu0
  %v962 = vsel %vm404, %v600, 0
  %v965 = vsel %vm404, %v601, 0
  %v968 = vsel %vm411, %v599, 0
  %970 = vmatprep.subr.mxu0 0.0
  %971 = vmatpush1.msra.mxu0 %v591
  %972 = vmatprep.subr.mxu0 0.0
  %973 = vmatpush1.msra.mxu0 %v592
  %974 = vmatprep.subr.mxu0 0.0
  %975 = vmatpush1.msra.mxu0 %v593
  %976 = vmatprep.subr.mxu0 0.0
  %977 = vmatpush1.msra.mxu0 %v594
  %978 = vmatprep.subr.mxu0 0.0
  %979 = vmatpush1.msra.mxu0 %v595
  %980 = vmatprep.subr.mxu0 0.0
  %981 = vmatpush1.msra.mxu0 %v596
  %982 = vmatprep.subr.mxu0 0.0
  %983 = vmatpush1.msra.mxu0 %v597
  %984 = vmatprep.subr.mxu0 0.0
  %985 = vmatpush1.msra.mxu0 %v598
  %986 = vmatprep.subr.mxu0 0.0
  %987 = vmatpush1.msra.mxu0 %v968
  %988 = vmatprep.subr.mxu0 0.0
  %989 = vmatpush1.msra.mxu0 0.0
  %990 = vmatprep.subr.mxu0 0.0
  %991 = vmatpush1.msra.mxu0 0.0
  %992 = vmatprep.subr.mxu0 0.0
  %993 = vmatpush1.msra.mxu0 0.0
  %994 = vmatprep.subr.mxu0 0.0
  %995 = vmatpush1.msra.mxu0 0.0
  %996 = vmatprep.subr.mxu0 0.0
  %997 = vmatpush1.msra.mxu0 0.0
  %998 = vmatprep.subr.mxu0 0.0
  %999 = vmatpush1.msra.mxu0 0.0
  %1000 = vmatprep.subr.mxu0 0.0
  %1001 = vmatpush1.msra.mxu0 0.0
  %1002 = vmatprep.subr.mxu0 0.0
  %1003 = vmatpush1.msra.mxu0 0.0
  %1004 = vmatprep.subr.mxu0 0.0
  %1005 = vmatpush1.msra.mxu0 0.0
  %1006 = vmatprep.subr.mxu0 0.0
  %1007 = vmatpush1.msra.mxu0 0.0
  %1008 = vmatprep.subr.mxu0 0.0
  %1009 = vmatpush1.msra.mxu0 0.0
  %1010 = vmatprep.subr.mxu0 0.0
  %1011 = vmatpush1.msra.mxu0 0.0
  %1012 = vmatprep.subr.mxu0 0.0
  %1013 = vmatpush1.msra.mxu0 0.0
  %1014 = vmatprep.subr.mxu0 0.0
  %1015 = vmatpush1.msra.mxu0 0.0
  %1016 = vmatprep.subr.mxu0 0.0
  %1017 = vmatpush1.msra.mxu0 0.0
  %1018 = vmatprep.subr.mxu0 0.0
  %1019 = vmatpush1.msra.mxu0 0.0
  %1020 = vmatprep.subr.mxu0 0.0
  %1021 = vmatpush1.msra.mxu0 0.0
  %1022 = vmatprep.subr.mxu0 0.0
  %1023 = vmatpush1.msra.mxu0 0.0
  %1024 = vmatprep.subr.mxu0 0.0
  %1025 = vmatpush1.msra.mxu0 0.0
  %1026 = vmatprep.subr.mxu0 0.0
  %1027 = vmatpush1.msra.mxu0 0.0
  %1028 = vmatprep.subr.mxu0 0.0
  %1029 = vmatpush1.msra.mxu0 0.0
  %1030 = vmatprep.subr.mxu0 0.0
  %1031 = vmatpush1.msra.mxu0 0.0
  %1032 = vmatprep.subr.mxu0 0.0
  %1033 = vmatpush1.msra.mxu0 0.0
  %1034 = vmatprep.mubr.f32.mxu0 0.0
  %1035 = vmatmul.mubr.f32.gmra.mrb[0].mxu0 %v962
  %v1036 = vpop.f32.mrb[0].mxu0
  %v1037 = vadd.f32 %v953, %v1036
  %v1038 = vpop.f32.mrb[0].mxu0
  %1039 = vmatprep.mubr.f32.mxu0 0.0
  %1040 = vmatmul.mubr.f32.gmra.mrb[0].mxu0 %v965
  %v1041 = vpop.f32.mrb[0].mxu0
  %v1042 = vadd.f32 %v958, %v1041
  %v1043 = vpop.f32.mrb[0].mxu0
  %1044 = vdwg.mxu0
  %v1045 = vld [vmem:[%s2 + $0xf0] sm:$0xff]
  %v1046 = vld [vmem:[%s2 + $0xf8] sm:$0xf]
  %1047 = vset.pattern.permute.xlu0 1
  %1048 = vperm.xlu0 %1047, %v604
  %v1049 = vpop.permute.xlu0 %1048
  %1050 = vset.pattern.permute.xlu0 1
  %1051 = vperm.xlu0 %1050, %v605
  %v1052 = vpop.permute.xlu0 %1051
  %1053 = vset.pattern.permute.xlu0 1
  %1054 = vperm.xlu0 %1053, %v606
  %v1055 = vpop.permute.xlu0 %1054
  %1056 = vset.pattern.permute.xlu0 1
  %1057 = vperm.xlu0 %1056, %v607
  %v1058 = vpop.permute.xlu0 %1057
  %1059 = vset.pattern.permute.xlu0 1
  %1060 = vperm.xlu0 %1059, %v608
  %v1061 = vpop.permute.xlu0 %1060
  %1062 = vset.pattern.permute.xlu0 1
  %1063 = vperm.xlu0 %1062, %v609
  %v1064 = vpop.permute.xlu0 %1063
  %1065 = vset.pattern.permute.xlu0 1
  %1066 = vperm.xlu0 %1065, %v610
  %v1067 = vpop.permute.xlu0 %1066
  %1068 = vset.pattern.permute.xlu0 1
  %1069 = vperm.xlu0 %1068, %v611
  %v1070 = vpop.permute.xlu0 %1069
  %1071 = vset.pattern.permute.xlu0 1
  %1072 = vperm.xlu0 %1071, %v612
  %v1073 = vpop.permute.xlu0 %1072
  %1074 = vset.pattern.permute.xlu0 1
  %1075 = vperm.xlu0 %1074, %v613
  %v1076 = vpop.permute.xlu0 %1075
  %1077 = vset.pattern.permute.xlu0 1
  %1078 = vperm.xlu0 %1077, %v614
  %v1079 = vpop.permute.xlu0 %1078
  %1080 = vset.pattern.permute.xlu0 1
  %1081 = vperm.xlu0 %1080, %v615
  %v1082 = vpop.permute.xlu0 %1081
  %1083 = vset.pattern.permute.xlu0 1
  %1084 = vperm.xlu0 %1083, %v616
  %v1085 = vpop.permute.xlu0 %1084
  %1086 = vset.pattern.permute.xlu0 1
  %1087 = vperm.xlu0 %1086, %v617
  %v1088 = vpop.permute.xlu0 %1087
  %1089 = vset.pattern.permute.xlu0 1
  %1090 = vperm.xlu0 %1089, %v618
  %v1091 = vpop.permute.xlu0 %1090
  %1092 = vset.pattern.permute.xlu0 1
  %1093 = vperm.xlu0 %1092, %v619
  %v1094 = vpop.permute.xlu0 %1093
  %1095 = vset.pattern.permute.xlu0 1
  %1096 = vperm.xlu0 %1095, %v620
  %v1097 = vpop.permute.xlu0 %1096
  %1098 = vset.pattern.permute.xlu0 1
  %1099 = vperm.xlu0 %1098, %v621
  %v1100 = vpop.permute.xlu0 %1099
  %1101 = vset.pattern.permute.xlu0 1
  %1102 = vperm.xlu0 %1101, %v622
  %v1103 = vpop.permute.xlu0 %1102
  %1104 = vset.pattern.permute.xlu0 1
  %1105 = vperm.xlu0 %1104, %v623
  %v1106 = vpop.permute.xlu0 %1105
  %1107 = vset.pattern.permute.xlu0 1
  %1108 = vperm.xlu0 %1107, %v624
  %v1109 = vpop.permute.xlu0 %1108
  %1110 = vset.pattern.permute.xlu0 1
  %1111 = vperm.xlu0 %1110, %v625
  %v1112 = vpop.permute.xlu0 %1111
  %1113 = vset.pattern.permute.xlu0 1
  %1114 = vperm.xlu0 %1113, %v626
  %v1115 = vpop.permute.xlu0 %1114
  %1116 = vset.pattern.permute.xlu0 1
  %1117 = vperm.xlu0 %1116, %v627
  %v1118 = vpop.permute.xlu0 %1117
  %v1119 = vlaneseq
  %v1120 = vshrl.u32 %v1119, 7
  %v1121 = vsub.s32 %v138, %v1120
  %v1122 = vrot.slane %v1049, %v1121
  %v1123 = vlaneseq
  %v1124 = vshrl.u32 %v1123, 7
  %v1125 = vsub.s32 %v143, %v1124
  %v1126 = vrot.slane %v1052, %v1125
  %v1127 = vsel %vm148, %v1126, %v1122
  %v1128 = vlaneseq
  %v1129 = vshrl.u32 %v1128, 7
  %v1130 = vsub.s32 %v138, %v1129
  %v1131 = vrot.slane %v1055, %v1130
  %v1132 = vlaneseq
  %v1133 = vshrl.u32 %v1132, 7
  %v1134 = vsub.s32 %v143, %v1133
  %v1135 = vrot.slane %v1058, %v1134
  %v1136 = vsel %vm148, %v1135, %v1131
  %v1137 = vlaneseq
  %v1138 = vshrl.u32 %v1137, 7
  %v1139 = vsub.s32 %v138, %v1138
  %v1140 = vrot.slane %v1061, %v1139
  %v1141 = vlaneseq
  %v1142 = vshrl.u32 %v1141, 7
  %v1143 = vsub.s32 %v143, %v1142
  %v1144 = vrot.slane %v1064, %v1143
  %v1145 = vsel %vm148, %v1144, %v1140
  %v1146 = vlaneseq
  %v1147 = vshrl.u32 %v1146, 7
  %v1148 = vsub.s32 %v138, %v1147
  %v1149 = vrot.slane %v1067, %v1148
  %v1150 = vlaneseq
  %v1151 = vshrl.u32 %v1150, 7
  %v1152 = vsub.s32 %v143, %v1151
  %v1153 = vrot.slane %v1070, %v1152
  %v1154 = vsel %vm148, %v1153, %v1149
  %v1155 = vlaneseq
  %v1156 = vshrl.u32 %v1155, 7
  %v1157 = vsub.s32 %v138, %v1156
  %v1158 = vrot.slane %v1073, %v1157
  %v1159 = vlaneseq
  %v1160 = vshrl.u32 %v1159, 7
  %v1161 = vsub.s32 %v143, %v1160
  %v1162 = vrot.slane %v1076, %v1161
  %v1163 = vsel %vm148, %v1162, %v1158
  %v1164 = vlaneseq
  %v1165 = vshrl.u32 %v1164, 7
  %v1166 = vsub.s32 %v138, %v1165
  %v1167 = vrot.slane %v1079, %v1166
  %v1168 = vlaneseq
  %v1169 = vshrl.u32 %v1168, 7
  %v1170 = vsub.s32 %v143, %v1169
  %v1171 = vrot.slane %v1082, %v1170
  %v1172 = vsel %vm148, %v1171, %v1167
  %v1173 = vlaneseq
  %v1174 = vshrl.u32 %v1173, 7
  %v1175 = vsub.s32 %v138, %v1174
  %v1176 = vrot.slane %v1085, %v1175
  %v1177 = vlaneseq
  %v1178 = vshrl.u32 %v1177, 7
  %v1179 = vsub.s32 %v143, %v1178
  %v1180 = vrot.slane %v1088, %v1179
  %v1181 = vsel %vm148, %v1180, %v1176
  %v1182 = vlaneseq
  %v1183 = vshrl.u32 %v1182, 7
  %v1184 = vsub.s32 %v138, %v1183
  %v1185 = vrot.slane %v1091, %v1184
  %v1186 = vlaneseq
  %v1187 = vshrl.u32 %v1186, 7
  %v1188 = vsub.s32 %v143, %v1187
  %v1189 = vrot.slane %v1094, %v1188
  %v1190 = vsel %vm148, %v1189, %v1185
  %v1191 = vlaneseq
  %v1192 = vshrl.u32 %v1191, 7
  %v1193 = vsub.s32 %v138, %v1192
  %v1194 = vrot.slane %v1097, %v1193
  %v1195 = vlaneseq
  %v1196 = vshrl.u32 %v1195, 7
  %v1197 = vsub.s32 %v143, %v1196
  %v1198 = vrot.slane %v1100, %v1197
  %v1199 = vsel %vm148, %v1198, %v1194
  %v1200 = vlaneseq
  %v1201 = vshrl.u32 %v1200, 7
  %v1202 = vsub.s32 %v138, %v1201
  %v1203 = vrot.slane %v1103, %v1202
  %v1204 = vlaneseq
  %v1205 = vshrl.u32 %v1204, 7
  %v1206 = vsub.s32 %v143, %v1205
  %v1207 = vrot.slane %v1106, %v1206
  %v1208 = vsel %vm148, %v1207, %v1203
  %v1209 = vlaneseq
  %v1210 = vshrl.u32 %v1209, 7
  %v1211 = vsub.s32 %v138, %v1210
  %v1212 = vrot.slane %v1109, %v1211
  %v1213 = vlaneseq
  %v1214 = vshrl.u32 %v1213, 7
  %v1215 = vsub.s32 %v143, %v1214
  %v1216 = vrot.slane %v1112, %v1215
  %v1217 = vsel %vm148, %v1216, %v1212
  %v1218 = vlaneseq
  %v1219 = vshrl.u32 %v1218, 7
  %v1220 = vsub.s32 %v138, %v1219
  %v1221 = vrot.slane %v1115, %v1220
  %v1222 = vlaneseq
  %v1223 = vshrl.u32 %v1222, 7
  %v1224 = vsub.s32 %v143, %v1223
  %v1225 = vrot.slane %v1118, %v1224
  %v1226 = vsel %vm148, %v1225, %v1221
  %v1227 = vsel %vm249, %v1136, %v1127
  %v1228 = vsel %vm251, %v1145, %v1227
  %v1229 = vsel %vm253, %v1154, %v1228
  %v1230 = vsel %vm255, %v1163, %v1229
  %v1231 = vsel %vm257, %v1172, %v1230
  %v1232 = vsel %vm259, %v1181, %v1231
  %v1233 = vsel %vm261, %v1190, %v1232
  %v1234 = vsel %vm249, %v1208, %v1199
  %v1235 = vsel %vm251, %v1217, %v1234
  %v1236 = vsel %vm253, %v1226, %v1235
  %1239 = vxpose.xlu0.b32.start [1/16] %v1233, 128
  %1240 = vxpose.xlu0.b32.cont [2/16] %v1236, 128
  %1241 = vxpose.xlu0.b32.cont [3/16] 0.0, 128
  %1242 = vxpose.xlu0.b32.cont [4/16] 0.0, 128
  %1243 = vxpose.xlu0.b32.cont [5/16] 0.0, 128
  %1244 = vxpose.xlu0.b32.cont [6/16] 0.0, 128
  %1245 = vxpose.xlu0.b32.cont [7/16] 0.0, 128
  %1246 = vxpose.xlu0.b32.cont [8/16] 0.0, 128
  %1247 = vxpose.xlu0.b32.cont [9/16] 0.0, 128
  %1248 = vxpose.xlu0.b32.cont [10/16] 0.0, 128
  %1249 = vxpose.xlu0.b32.cont [11/16] 0.0, 128
  %1250 = vxpose.xlu0.b32.cont [12/16] 0.0, 128
  %1251 = vxpose.xlu0.b32.cont [13/16] 0.0, 128
  %1252 = vxpose.xlu0.b32.cont [14/16] 0.0, 128
  %1253 = vxpose.xlu0.b32.cont [15/16] 0.0, 128
  %1254 = vxpose.xlu0.b32.end [16/16] 0.0, 128
  %v1255 = vpop.trf.xlu0
  %v1256 = vpop.trf.xlu0
  %v1257 = vpop.trf.xlu0
  %v1258 = vpop.trf.xlu0
  %v1259 = vpop.trf.xlu0
  %v1260 = vpop.trf.xlu0
  %v1261 = vpop.trf.xlu0
  %v1262 = vpop.trf.xlu0
  %v1263 = vpop.trf.xlu0
  %v1264 = vpop.trf.xlu0
  %v1265 = vpop.trf.xlu0
  %v1266 = vpop.trf.xlu0
  %v1267 = vpop.trf.xlu0
  %v1268 = vpop.trf.xlu0
  %v1269 = vpop.trf.xlu0
  %v1270 = vpop.trf.xlu0
  %v1272 = vsel %vm876, %v1255, 0
  %v1275 = vsel %vm876, %v1256, 0
  %v1278 = vsel %vm268, %v1046, 0
  %1280 = vmatprep.subr.mxu0 0.0
  %1281 = vmatpush1.msra.mxu0 %v1045
  %1282 = vmatprep.subr.mxu0 0.0
  %1283 = vmatpush1.msra.mxu0 %v1278
  %1284 = vmatprep.subr.mxu0 0.0
  %1285 = vmatpush1.msra.mxu0 0.0
  %1286 = vmatprep.subr.mxu0 0.0
  %1287 = vmatpush1.msra.mxu0 0.0
  %1288 = vmatprep.subr.mxu0 0.0
  %1289 = vmatpush1.msra.mxu0 0.0
  %1290 = vmatprep.subr.mxu0 0.0
  %1291 = vmatpush1.msra.mxu0 0.0
  %1292 = vmatprep.subr.mxu0 0.0
  %1293 = vmatpush1.msra.mxu0 0.0
  %1294 = vmatprep.subr.mxu0 0.0
  %1295 = vmatpush1.msra.mxu0 0.0
  %1296 = vmatprep.subr.mxu0 0.0
  %1297 = vmatpush1.msra.mxu0 0.0
  %1298 = vmatprep.subr.mxu0 0.0
  %1299 = vmatpush1.msra.mxu0 0.0
  %1300 = vmatprep.subr.mxu0 0.0
  %1301 = vmatpush1.msra.mxu0 0.0
  %1302 = vmatprep.subr.mxu0 0.0
  %1303 = vmatpush1.msra.mxu0 0.0
  %1304 = vmatprep.subr.mxu0 0.0
  %1305 = vmatpush1.msra.mxu0 0.0
  %1306 = vmatprep.subr.mxu0 0.0
  %1307 = vmatpush1.msra.mxu0 0.0
  %1308 = vmatprep.subr.mxu0 0.0
  %1309 = vmatpush1.msra.mxu0 0.0
  %1310 = vmatprep.subr.mxu0 0.0
  %1311 = vmatpush1.msra.mxu0 0.0
  %1312 = vmatprep.subr.mxu0 0.0
  %1313 = vmatpush1.msra.mxu0 0.0
  %1314 = vmatprep.subr.mxu0 0.0
  %1315 = vmatpush1.msra.mxu0 0.0
  %1316 = vmatprep.subr.mxu0 0.0
  %1317 = vmatpush1.msra.mxu0 0.0
  %1318 = vmatprep.subr.mxu0 0.0
  %1319 = vmatpush1.msra.mxu0 0.0
  %1320 = vmatprep.subr.mxu0 0.0
  %1321 = vmatpush1.msra.mxu0 0.0
  %1322 = vmatprep.subr.mxu0 0.0
  %1323 = vmatpush1.msra.mxu0 0.0
  %1324 = vmatprep.subr.mxu0 0.0
  %1325 = vmatpush1.msra.mxu0 0.0
  %1326 = vmatprep.subr.mxu0 0.0
  %1327 = vmatpush1.msra.mxu0 0.0
  %1328 = vmatprep.subr.mxu0 0.0
  %1329 = vmatpush1.msra.mxu0 0.0
  %1330 = vmatprep.subr.mxu0 0.0
  %1331 = vmatpush1.msra.mxu0 0.0
  %1332 = vmatprep.subr.mxu0 0.0
  %1333 = vmatpush1.msra.mxu0 0.0
  %1334 = vmatprep.subr.mxu0 0.0
  %1335 = vmatpush1.msra.mxu0 0.0
  %1336 = vmatprep.subr.mxu0 0.0
  %1337 = vmatpush1.msra.mxu0 0.0
  %1338 = vmatprep.subr.mxu0 0.0
  %1339 = vmatpush1.msra.mxu0 0.0
  %1340 = vmatprep.subr.mxu0 0.0
  %1341 = vmatpush1.msra.mxu0 0.0
  %1342 = vmatprep.subr.mxu0 0.0
  %1343 = vmatpush1.msra.mxu0 0.0
  %1344 = vmatprep.mubr.f32.mxu0 0.0
  %1345 = vmatmul.mubr.f32.gmra.mrb[0].mxu0 %v1272
  %v1346 = vpop.f32.mrb[0].mxu0
  %v1347 = vadd.f32 0.0, %v1346
  %v1348 = vpop.f32.mrb[0].mxu0
  %1349 = vmatprep.mubr.f32.mxu0 0.0
  %1350 = vmatmul.mubr.f32.gmra.mrb[0].mxu0 %v1275
  %v1351 = vpop.f32.mrb[0].mxu0
  %v1352 = vadd.f32 0.0, %v1351
  %v1353 = vpop.f32.mrb[0].mxu0
  %1354 = vdwg.mxu0
  %v1355 = vadd.f32 %v1037, %v1347
  %v1356 = vadd.f32 %v1042, %v1352
  %v1357 = vld [vmem:[%s2 + $0x100] sm:$0xff]
  %v1358 = vld [vmem:[%s2 + $0x108] sm:$0xf]
  %1359 = vset.pattern.permute.xlu0 2
  %1360 = vperm.xlu0 %1359, %v604
  %v1361 = vpop.permute.xlu0 %1360
  %1362 = vset.pattern.permute.xlu0 2
  %1363 = vperm.xlu0 %1362, %v605
  %v1364 = vpop.permute.xlu0 %1363
  %1365 = vset.pattern.permute.xlu0 2
  %1366 = vperm.xlu0 %1365, %v606
  %v1367 = vpop.permute.xlu0 %1366
  %1368 = vset.pattern.permute.xlu0 2
  %1369 = vperm.xlu0 %1368, %v607
  %v1370 = vpop.permute.xlu0 %1369
  %1371 = vset.pattern.permute.xlu0 2
  %1372 = vperm.xlu0 %1371, %v608
  %v1373 = vpop.permute.xlu0 %1372
  %1374 = vset.pattern.permute.xlu0 2
  %1375 = vperm.xlu0 %1374, %v609
  %v1376 = vpop.permute.xlu0 %1375
  %1377 = vset.pattern.permute.xlu0 2
  %1378 = vperm.xlu0 %1377, %v610
  %v1379 = vpop.permute.xlu0 %1378
  %1380 = vset.pattern.permute.xlu0 2
  %1381 = vperm.xlu0 %1380, %v611
  %v1382 = vpop.permute.xlu0 %1381
  %1383 = vset.pattern.permute.xlu0 2
  %1384 = vperm.xlu0 %1383, %v612
  %v1385 = vpop.permute.xlu0 %1384
  %1386 = vset.pattern.permute.xlu0 2
  %1387 = vperm.xlu0 %1386, %v613
  %v1388 = vpop.permute.xlu0 %1387
  %1389 = vset.pattern.permute.xlu0 2
  %1390 = vperm.xlu0 %1389, %v614
  %v1391 = vpop.permute.xlu0 %1390
  %1392 = vset.pattern.permute.xlu0 2
  %1393 = vperm.xlu0 %1392, %v615
  %v1394 = vpop.permute.xlu0 %1393
  %1395 = vset.pattern.permute.xlu0 2
  %1396 = vperm.xlu0 %1395, %v616
  %v1397 = vpop.permute.xlu0 %1396
  %1398 = vset.pattern.permute.xlu0 2
  %1399 = vperm.xlu0 %1398, %v617
  %v1400 = vpop.permute.xlu0 %1399
  %1401 = vset.pattern.permute.xlu0 2
  %1402 = vperm.xlu0 %1401, %v618
  %v1403 = vpop.permute.xlu0 %1402
  %1404 = vset.pattern.permute.xlu0 2
  %1405 = vperm.xlu0 %1404, %v619
  %v1406 = vpop.permute.xlu0 %1405
  %1407 = vset.pattern.permute.xlu0 2
  %1408 = vperm.xlu0 %1407, %v620
  %v1409 = vpop.permute.xlu0 %1408
  %1410 = vset.pattern.permute.xlu0 2
  %1411 = vperm.xlu0 %1410, %v621
  %v1412 = vpop.permute.xlu0 %1411
  %1413 = vset.pattern.permute.xlu0 2
  %1414 = vperm.xlu0 %1413, %v622
  %v1415 = vpop.permute.xlu0 %1414
  %1416 = vset.pattern.permute.xlu0 2
  %1417 = vperm.xlu0 %1416, %v623
  %v1418 = vpop.permute.xlu0 %1417
  %1419 = vset.pattern.permute.xlu0 2
  %1420 = vperm.xlu0 %1419, %v624
  %v1421 = vpop.permute.xlu0 %1420
  %1422 = vset.pattern.permute.xlu0 2
  %1423 = vperm.xlu0 %1422, %v625
  %v1424 = vpop.permute.xlu0 %1423
  %1425 = vset.pattern.permute.xlu0 2
  %1426 = vperm.xlu0 %1425, %v626
  %v1427 = vpop.permute.xlu0 %1426
  %1428 = vset.pattern.permute.xlu0 2
  %1429 = vperm.xlu0 %1428, %v627
  %v1430 = vpop.permute.xlu0 %1429
  %v1431 = vlaneseq
  %v1432 = vshrl.u32 %v1431, 7
  %v1433 = vsub.s32 %v138, %v1432
  %v1434 = vrot.slane %v1361, %v1433
  %v1435 = vlaneseq
  %v1436 = vshrl.u32 %v1435, 7
  %v1437 = vsub.s32 %v143, %v1436
  %v1438 = vrot.slane %v1364, %v1437
  %v1439 = vsel %vm148, %v1438, %v1434
  %v1440 = vlaneseq
  %v1441 = vshrl.u32 %v1440, 7
  %v1442 = vsub.s32 %v138, %v1441
  %v1443 = vrot.slane %v1367, %v1442
  %v1444 = vlaneseq
  %v1445 = vshrl.u32 %v1444, 7
  %v1446 = vsub.s32 %v143, %v1445
  %v1447 = vrot.slane %v1370, %v1446
  %v1448 = vsel %vm148, %v1447, %v1443
  %v1449 = vlaneseq
  %v1450 = vshrl.u32 %v1449, 7
  %v1451 = vsub.s32 %v138, %v1450
  %v1452 = vrot.slane %v1373, %v1451
  %v1453 = vlaneseq
  %v1454 = vshrl.u32 %v1453, 7
  %v1455 = vsub.s32 %v143, %v1454
  %v1456 = vrot.slane %v1376, %v1455
  %v1457 = vsel %vm148, %v1456, %v1452
  %v1458 = vlaneseq
  %v1459 = vshrl.u32 %v1458, 7
  %v1460 = vsub.s32 %v138, %v1459
  %v1461 = vrot.slane %v1379, %v1460
  %v1462 = vlaneseq
  %v1463 = vshrl.u32 %v1462, 7
  %v1464 = vsub.s32 %v143, %v1463
  %v1465 = vrot.slane %v1382, %v1464
  %v1466 = vsel %vm148, %v1465, %v1461
  %v1467 = vlaneseq
  %v1468 = vshrl.u32 %v1467, 7
  %v1469 = vsub.s32 %v138, %v1468
  %v1470 = vrot.slane %v1385, %v1469
  %v1471 = vlaneseq
  %v1472 = vshrl.u32 %v1471, 7
  %v1473 = vsub.s32 %v143, %v1472
  %v1474 = vrot.slane %v1388, %v1473
  %v1475 = vsel %vm148, %v1474, %v1470
  %v1476 = vlaneseq
  %v1477 = vshrl.u32 %v1476, 7
  %v1478 = vsub.s32 %v138, %v1477
  %v1479 = vrot.slane %v1391, %v1478
  %v1480 = vlaneseq
  %v1481 = vshrl.u32 %v1480, 7
  %v1482 = vsub.s32 %v143, %v1481
  %v1483 = vrot.slane %v1394, %v1482
  %v1484 = vsel %vm148, %v1483, %v1479
  %v1485 = vlaneseq
  %v1486 = vshrl.u32 %v1485, 7
  %v1487 = vsub.s32 %v138, %v1486
  %v1488 = vrot.slane %v1397, %v1487
  %v1489 = vlaneseq
  %v1490 = vshrl.u32 %v1489, 7
  %v1491 = vsub.s32 %v143, %v1490
  %v1492 = vrot.slane %v1400, %v1491
  %v1493 = vsel %vm148, %v1492, %v1488
  %v1494 = vlaneseq
  %v1495 = vshrl.u32 %v1494, 7
  %v1496 = vsub.s32 %v138, %v1495
  %v1497 = vrot.slane %v1403, %v1496
  %v1498 = vlaneseq
  %v1499 = vshrl.u32 %v1498, 7
  %v1500 = vsub.s32 %v143, %v1499
  %v1501 = vrot.slane %v1406, %v1500
  %v1502 = vsel %vm148, %v1501, %v1497
  %v1503 = vlaneseq
  %v1504 = vshrl.u32 %v1503, 7
  %v1505 = vsub.s32 %v138, %v1504
  %v1506 = vrot.slane %v1409, %v1505
  %v1507 = vlaneseq
  %v1508 = vshrl.u32 %v1507, 7
  %v1509 = vsub.s32 %v143, %v1508
  %v1510 = vrot.slane %v1412, %v1509
  %v1511 = vsel %vm148, %v1510, %v1506
  %v1512 = vlaneseq
  %v1513 = vshrl.u32 %v1512, 7
  %v1514 = vsub.s32 %v138, %v1513
  %v1515 = vrot.slane %v1415, %v1514
  %v1516 = vlaneseq
  %v1517 = vshrl.u32 %v1516, 7
  %v1518 = vsub.s32 %v143, %v1517
  %v1519 = vrot.slane %v1418, %v1518
  %v1520 = vsel %vm148, %v1519, %v1515
  %v1521 = vlaneseq
  %v1522 = vshrl.u32 %v1521, 7
  %v1523 = vsub.s32 %v138, %v1522
  %v1524 = vrot.slane %v1421, %v1523
  %v1525 = vlaneseq
  %v1526 = vshrl.u32 %v1525, 7
  %v1527 = vsub.s32 %v143, %v1526
  %v1528 = vrot.slane %v1424, %v1527
  %v1529 = vsel %vm148, %v1528, %v1524
  %v1530 = vlaneseq
  %v1531 = vshrl.u32 %v1530, 7
  %v1532 = vsub.s32 %v138, %v1531
  %v1533 = vrot.slane %v1427, %v1532
  %v1534 = vlaneseq
  %v1535 = vshrl.u32 %v1534, 7
  %v1536 = vsub.s32 %v143, %v1535
  %v1537 = vrot.slane %v1430, %v1536
  %v1538 = vsel %vm148, %v1537, %v1533
  %v1539 = vsel %vm249, %v1448, %v1439
  %v1540 = vsel %vm251, %v1457, %v1539
  %v1541 = vsel %vm253, %v1466, %v1540
  %v1542 = vsel %vm255, %v1475, %v1541
  %v1543 = vsel %vm257, %v1484, %v1542
  %v1544 = vsel %vm259, %v1493, %v1543
  %v1545 = vsel %vm261, %v1502, %v1544
  %v1546 = vsel %vm249, %v1520, %v1511
  %v1547 = vsel %vm251, %v1529, %v1546
  %v1548 = vsel %vm253, %v1538, %v1547
  %1551 = vxpose.xlu0.b32.start [1/16] %v1545, 128
  %1552 = vxpose.xlu0.b32.cont [2/16] %v1548, 128
  %1553 = vxpose.xlu0.b32.cont [3/16] 0.0, 128
  %1554 = vxpose.xlu0.b32.cont [4/16] 0.0, 128
  %1555 = vxpose.xlu0.b32.cont [5/16] 0.0, 128
  %1556 = vxpose.xlu0.b32.cont [6/16] 0.0, 128
  %1557 = vxpose.xlu0.b32.cont [7/16] 0.0, 128
  %1558 = vxpose.xlu0.b32.cont [8/16] 0.0, 128
  %1559 = vxpose.xlu0.b32.cont [9/16] 0.0, 128
  %1560 = vxpose.xlu0.b32.cont [10/16] 0.0, 128
  %1561 = vxpose.xlu0.b32.cont [11/16] 0.0, 128
  %1562 = vxpose.xlu0.b32.cont [12/16] 0.0, 128
  %1563 = vxpose.xlu0.b32.cont [13/16] 0.0, 128
  %1564 = vxpose.xlu0.b32.cont [14/16] 0.0, 128
  %1565 = vxpose.xlu0.b32.cont [15/16] 0.0, 128
  %1566 = vxpose.xlu0.b32.end [16/16] 0.0, 128
  %v1567 = vpop.trf.xlu0
  %v1568 = vpop.trf.xlu0
  %v1569 = vpop.trf.xlu0
  %v1570 = vpop.trf.xlu0
  %v1571 = vpop.trf.xlu0
  %v1572 = vpop.trf.xlu0
  %v1573 = vpop.trf.xlu0
  %v1574 = vpop.trf.xlu0
  %v1575 = vpop.trf.xlu0
  %v1576 = vpop.trf.xlu0
  %v1577 = vpop.trf.xlu0
  %v1578 = vpop.trf.xlu0
  %v1579 = vpop.trf.xlu0
  %v1580 = vpop.trf.xlu0
  %v1581 = vpop.trf.xlu0
  %v1582 = vpop.trf.xlu0
  %v1584 = vsel %vm876, %v1567, 0
  %v1587 = vsel %vm876, %v1568, 0
  %v1590 = vsel %vm268, %v1358, 0
  %1592 = vmatprep.subr.mxu0 0.0
  %1593 = vmatpush1.msra.mxu0 %v1357
  %1594 = vmatprep.subr.mxu0 0.0
  %1595 = vmatpush1.msra.mxu0 %v1590
  %1596 = vmatprep.subr.mxu0 0.0
  %1597 = vmatpush1.msra.mxu0 0.0
  %1598 = vmatprep.subr.mxu0 0.0
  %1599 = vmatpush1.msra.mxu0 0.0
  %1600 = vmatprep.subr.mxu0 0.0
  %1601 = vmatpush1.msra.mxu0 0.0
  %1602 = vmatprep.subr.mxu0 0.0
  %1603 = vmatpush1.msra.mxu0 0.0
  %1604 = vmatprep.subr.mxu0 0.0
  %1605 = vmatpush1.msra.mxu0 0.0
  %1606 = vmatprep.subr.mxu0 0.0
  %1607 = vmatpush1.msra.mxu0 0.0
  %1608 = vmatprep.subr.mxu0 0.0
  %1609 = vmatpush1.msra.mxu0 0.0
  %1610 = vmatprep.subr.mxu0 0.0
  %1611 = vmatpush1.msra.mxu0 0.0
  %1612 = vmatprep.subr.mxu0 0.0
  %1613 = vmatpush1.msra.mxu0 0.0
  %1614 = vmatprep.subr.mxu0 0.0
  %1615 = vmatpush1.msra.mxu0 0.0
  %1616 = vmatprep.subr.mxu0 0.0
  %1617 = vmatpush1.msra.mxu0 0.0
  %1618 = vmatprep.subr.mxu0 0.0
  %1619 = vmatpush1.msra.mxu0 0.0
  %1620 = vmatprep.subr.mxu0 0.0
  %1621 = vmatpush1.msra.mxu0 0.0
  %1622 = vmatprep.subr.mxu0 0.0
  %1623 = vmatpush1.msra.mxu0 0.0
  %1624 = vmatprep.subr.mxu0 0.0
  %1625 = vmatpush1.msra.mxu0 0.0
  %1626 = vmatprep.subr.mxu0 0.0
  %1627 = vmatpush1.msra.mxu0 0.0
  %1628 = vmatprep.subr.mxu0 0.0
  %1629 = vmatpush1.msra.mxu0 0.0
  %1630 = vmatprep.subr.mxu0 0.0
  %1631 = vmatpush1.msra.mxu0 0.0
  %1632 = vmatprep.subr.mxu0 0.0
  %1633 = vmatpush1.msra.mxu0 0.0
  %1634 = vmatprep.subr.mxu0 0.0
  %1635 = vmatpush1.msra.mxu0 0.0
  %1636 = vmatprep.subr.mxu0 0.0
  %1637 = vmatpush1.msra.mxu0 0.0
  %1638 = vmatprep.subr.mxu0 0.0
  %1639 = vmatpush1.msra.mxu0 0.0
  %1640 = vmatprep.subr.mxu0 0.0
  %1641 = vmatpush1.msra.mxu0 0.0
  %1642 = vmatprep.subr.mxu0 0.0
  %1643 = vmatpush1.msra.mxu0 0.0
  %1644 = vmatprep.subr.mxu0 0.0
  %1645 = vmatpush1.msra.mxu0 0.0
  %1646 = vmatprep.subr.mxu0 0.0
  %1647 = vmatpush1.msra.mxu0 0.0
  %1648 = vmatprep.subr.mxu0 0.0
  %1649 = vmatpush1.msra.mxu0 0.0
  %1650 = vmatprep.subr.mxu0 0.0
  %1651 = vmatpush1.msra.mxu0 0.0
  %1652 = vmatprep.subr.mxu0 0.0
  %1653 = vmatpush1.msra.mxu0 0.0
  %1654 = vmatprep.subr.mxu0 0.0
  %1655 = vmatpush1.msra.mxu0 0.0
  %1656 = vmatprep.mubr.f32.mxu0 0.0
  %1657 = vmatmul.mubr.f32.gmra.mrb[0].mxu0 %v1584
  %v1658 = vpop.f32.mrb[0].mxu0
  %v1659 = vadd.f32 0.0, %v1658
  %v1660 = vpop.f32.mrb[0].mxu0
  %1661 = vmatprep.mubr.f32.mxu0 0.0
  %1662 = vmatmul.mubr.f32.gmra.mrb[0].mxu0 %v1587
  %v1663 = vpop.f32.mrb[0].mxu0
  %v1664 = vadd.f32 0.0, %v1663
  %v1665 = vpop.f32.mrb[0].mxu0
  %1666 = vdwg.mxu0
  %v1667 = vadd.f32 %v1355, %v1659
  %v1668 = vadd.f32 %v1356, %v1664
  %v1669 = vmax.f32 %v1667, 0.0
  %v1670 = vmax.f32 %v1668, 0.0
  %v1671 = vld [vmem:[%s2 + $0x158] sm:$0xff]
  %v1672 = vld [vmem:[%s2 + $0x160] sm:$0xff]
  %v1673 = vld [vmem:[%s2 + $0x168] sm:$0xff]
  %v1674 = vld [vmem:[%s2 + $0x170] sm:$0xff]
  %v1675 = vld [vmem:[%s2 + $0x178] sm:$0xff]
  %v1676 = vld [vmem:[%s2 + $0x180] sm:$0xff]
  %v1677 = vld [vmem:[%s2 + $0x188] sm:$0xff]
  %v1678 = vld [vmem:[%s2 + $0x190] sm:$0xff]
  %v1679 = vld [vmem:[%s2 + $0x198] sm:$0x1]
  %v1680 = vsel %vm401, %v1669, 1.0
  %v1681 = vsel %vm401, %v1670, 1.0
  %v1683 = vsel %vm404, %v1680, 0
  %v1686 = vsel %vm404, %v1681, 0
  %v1689 = vsel %vm411, %v1679, 0
  %1691 = vmatprep.subr.mxu0 0.0
  %1692 = vmatpush1.msra.mxu0 %v1671
  %1693 = vmatprep.subr.mxu0 0.0
  %1694 = vmatpush1.msra.mxu0 %v1672
  %1695 = vmatprep.subr.mxu0 0.0
  %1696 = vmatpush1.msra.mxu0 %v1673
  %1697 = vmatprep.subr.mxu0 0.0
  %1698 = vmatpush1.msra.mxu0 %v1674
  %1699 = vmatprep.subr.mxu0 0.0
  %1700 = vmatpush1.msra.mxu0 %v1675
  %1701 = vmatprep.subr.mxu0 0.0
  %1702 = vmatpush1.msra.mxu0 %v1676
  %1703 = vmatprep.subr.mxu0 0.0
  %1704 = vmatpush1.msra.mxu0 %v1677
  %1705 = vmatprep.subr.mxu0 0.0
  %1706 = vmatpush1.msra.mxu0 %v1678
  %1707 = vmatprep.subr.mxu0 0.0
  %1708 = vmatpush1.msra.mxu0 %v1689
  %1709 = vmatprep.subr.mxu0 0.0
  %1710 = vmatpush1.msra.mxu0 0.0
  %1711 = vmatprep.subr.mxu0 0.0
  %1712 = vmatpush1.msra.mxu0 0.0
  %1713 = vmatprep.subr.mxu0 0.0
  %1714 = vmatpush1.msra.mxu0 0.0
  %1715 = vmatprep.subr.mxu0 0.0
  %1716 = vmatpush1.msra.mxu0 0.0
  %1717 = vmatprep.subr.mxu0 0.0
  %1718 = vmatpush1.msra.mxu0 0.0
  %1719 = vmatprep.subr.mxu0 0.0
  %1720 = vmatpush1.msra.mxu0 0.0
  %1721 = vmatprep.subr.mxu0 0.0
  %1722 = vmatpush1.msra.mxu0 0.0
  %1723 = vmatprep.subr.mxu0 0.0
  %1724 = vmatpush1.msra.mxu0 0.0
  %1725 = vmatprep.subr.mxu0 0.0
  %1726 = vmatpush1.msra.mxu0 0.0
  %1727 = vmatprep.subr.mxu0 0.0
  %1728 = vmatpush1.msra.mxu0 0.0
  %1729 = vmatprep.subr.mxu0 0.0
  %1730 = vmatpush1.msra.mxu0 0.0
  %1731 = vmatprep.subr.mxu0 0.0
  %1732 = vmatpush1.msra.mxu0 0.0
  %1733 = vmatprep.subr.mxu0 0.0
  %1734 = vmatpush1.msra.mxu0 0.0
  %1735 = vmatprep.subr.mxu0 0.0
  %1736 = vmatpush1.msra.mxu0 0.0
  %1737 = vmatprep.subr.mxu0 0.0
  %1738 = vmatpush1.msra.mxu0 0.0
  %1739 = vmatprep.subr.mxu0 0.0
  %1740 = vmatpush1.msra.mxu0 0.0
  %1741 = vmatprep.subr.mxu0 0.0
  %1742 = vmatpush1.msra.mxu0 0.0
  %1743 = vmatprep.subr.mxu0 0.0
  %1744 = vmatpush1.msra.mxu0 0.0
  %1745 = vmatprep.subr.mxu0 0.0
  %1746 = vmatpush1.msra.mxu0 0.0
  %1747 = vmatprep.subr.mxu0 0.0
  %1748 = vmatpush1.msra.mxu0 0.0
  %1749 = vmatprep.subr.mxu0 0.0
  %1750 = vmatpush1.msra.mxu0 0.0
  %1751 = vmatprep.subr.mxu0 0.0
  %1752 = vmatpush1.msra.mxu0 0.0
  %1753 = vmatprep.subr.mxu0 0.0
  %1754 = vmatpush1.msra.mxu0 0.0
  %1755 = vmatprep.mubr.f32.mxu0 0.0
  %1756 = vmatmul.mubr.f32.gmra.mrb[0].mxu0 %v1683
  %v1757 = vpop.f32.mrb[0].mxu0
  %v1758 = vadd.f32 0.0, %v1757
  %v1759 = vpop.f32.mrb[0].mxu0
  %1760 = vmatprep.mubr.f32.mxu0 0.0
  %1761 = vmatmul.mubr.f32.gmra.mrb[0].mxu0 %v1686
  %v1762 = vpop.f32.mrb[0].mxu0
  %v1763 = vadd.f32 0.0, %v1762
  %v1764 = vpop.f32.mrb[0].mxu0
  %1765 = vdwg.mxu0
  %v1766 = vmax.f32 %v1758, 0.0
  %v1767 = vmax.f32 %v1763, 0.0
  %v1768 = vld [vmem:[%s2 + $0x1a0] sm:$0xff]
  %v1769 = vld [vmem:[%s2 + $0x1a8] sm:$0xff]
  %v1770 = vld [vmem:[%s2 + $0x1b0] sm:$0xff]
  %v1771 = vld [vmem:[%s2 + $0x1b8] sm:$0xff]
  %v1772 = vld [vmem:[%s2 + $0x1c0] sm:$0xff]
  %v1773 = vld [vmem:[%s2 + $0x1c8] sm:$0xff]
  %v1774 = vld [vmem:[%s2 + $0x1d0] sm:$0xff]
  %v1775 = vld [vmem:[%s2 + $0x1d8] sm:$0xff]
  %v1776 = vld [vmem:[%s2 + $0x1e0] sm:$0x1]
  %v1777 = vsel %vm401, %v1766, 1.0
  %v1778 = vsel %vm401, %v1767, 1.0
  %v1780 = vsel %vm404, %v1777, 0
  %v1783 = vsel %vm404, %v1778, 0
  %v1786 = vsel %vm411, %v1776, 0
  %1788 = vmatprep.subr.mxu0 0.0
  %1789 = vmatpush1.msra.mxu0 %v1768
  %1790 = vmatprep.subr.mxu0 0.0
  %1791 = vmatpush1.msra.mxu0 %v1769
  %1792 = vmatprep.subr.mxu0 0.0
  %1793 = vmatpush1.msra.mxu0 %v1770
  %1794 = vmatprep.subr.mxu0 0.0
  %1795 = vmatpush1.msra.mxu0 %v1771
  %1796 = vmatprep.subr.mxu0 0.0
  %1797 = vmatpush1.msra.mxu0 %v1772
  %1798 = vmatprep.subr.mxu0 0.0
  %1799 = vmatpush1.msra.mxu0 %v1773
  %1800 = vmatprep.subr.mxu0 0.0
  %1801 = vmatpush1.msra.mxu0 %v1774
  %1802 = vmatprep.subr.mxu0 0.0
  %1803 = vmatpush1.msra.mxu0 %v1775
  %1804 = vmatprep.subr.mxu0 0.0
  %1805 = vmatpush1.msra.mxu0 %v1786
  %1806 = vmatprep.subr.mxu0 0.0
  %1807 = vmatpush1.msra.mxu0 0.0
  %1808 = vmatprep.subr.mxu0 0.0
  %1809 = vmatpush1.msra.mxu0 0.0
  %1810 = vmatprep.subr.mxu0 0.0
  %1811 = vmatpush1.msra.mxu0 0.0
  %1812 = vmatprep.subr.mxu0 0.0
  %1813 = vmatpush1.msra.mxu0 0.0
  %1814 = vmatprep.subr.mxu0 0.0
  %1815 = vmatpush1.msra.mxu0 0.0
  %1816 = vmatprep.subr.mxu0 0.0
  %1817 = vmatpush1.msra.mxu0 0.0
  %1818 = vmatprep.subr.mxu0 0.0
  %1819 = vmatpush1.msra.mxu0 0.0
  %1820 = vmatprep.subr.mxu0 0.0
  %1821 = vmatpush1.msra.mxu0 0.0
  %1822 = vmatprep.subr.mxu0 0.0
  %1823 = vmatpush1.msra.mxu0 0.0
  %1824 = vmatprep.subr.mxu0 0.0
  %1825 = vmatpush1.msra.mxu0 0.0
  %1826 = vmatprep.subr.mxu0 0.0
  %1827 = vmatpush1.msra.mxu0 0.0
  %1828 = vmatprep.subr.mxu0 0.0
  %1829 = vmatpush1.msra.mxu0 0.0
  %1830 = vmatprep.subr.mxu0 0.0
  %1831 = vmatpush1.msra.mxu0 0.0
  %1832 = vmatprep.subr.mxu0 0.0
  %1833 = vmatpush1.msra.mxu0 0.0
  %1834 = vmatprep.subr.mxu0 0.0
  %1835 = vmatpush1.msra.mxu0 0.0
  %1836 = vmatprep.subr.mxu0 0.0
  %1837 = vmatpush1.msra.mxu0 0.0
  %1838 = vmatprep.subr.mxu0 0.0
  %1839 = vmatpush1.msra.mxu0 0.0
  %1840 = vmatprep.subr.mxu0 0.0
  %1841 = vmatpush1.msra.mxu0 0.0
  %1842 = vmatprep.subr.mxu0 0.0
  %1843 = vmatpush1.msra.mxu0 0.0
  %1844 = vmatprep.subr.mxu0 0.0
  %1845 = vmatpush1.msra.mxu0 0.0
  %1846 = vmatprep.subr.mxu0 0.0
  %1847 = vmatpush1.msra.mxu0 0.0
  %1848 = vmatprep.subr.mxu0 0.0
  %1849 = vmatpush1.msra.mxu0 0.0
  %1850 = vmatprep.subr.mxu0 0.0
  %1851 = vmatpush1.msra.mxu0 0.0
  %1852 = vmatprep.mubr.f32.mxu0 0.0
  %1853 = vmatmul.mubr.f32.gmra.mrb[0].mxu0 %v1780
  %v1854 = vpop.f32.mrb[0].mxu0
  %v1855 = vadd.f32 0.0, %v1854
  %v1856 = vpop.f32.mrb[0].mxu0
  %1857 = vmatprep.mubr.f32.mxu0 0.0
  %1858 = vmatmul.mubr.f32.gmra.mrb[0].mxu0 %v1783
  %v1859 = vpop.f32.mrb[0].mxu0
  %v1860 = vadd.f32 0.0, %v1859
  %v1861 = vpop.f32.mrb[0].mxu0
  %1862 = vdwg.mxu0
  %1863 = vst.msk [vmem:[%s3] sm:$0xff] %vm876, %v1855
  %1864 = vst.msk [vmem:[%s3 + $0x8] sm:$0xff] %vm876, %v1860
  // Predicated region
  $region14: #{stditrvirlong01_forward.1} parent=0 // pred_check
    _
  $region15: #{stditrvirlong01_forward.1} parent=0 // pred_check_branch
    %1866 = sbr.rel (0) target = $region17
  $region16: #{stditrvirlong01_forward.1} parent=0 // pred_region
    _
  $region17: #{stditrvirlong01_forward.1} parent=0 // pred_fallthru
    _
  // Predicated region
  $region18: #{stditrvirlong01_forward.1} parent=0 // pred_check
    _
  $region19: #{stditrvirlong01_forward.1} parent=0 // pred_check_branch
    %1868 = sbr.rel (0) target = $region21
  $region20: #{stditrvirlong01_forward.1} parent=0 // pred_region
    _
  $region21: #{stditrvirlong01_forward.1} parent=0 // pred_fallthru
    _

</llo_original>
